<compile_context>
chip_gen: v5e
topology: v5e:2x2
jax: 0.10.0
libtpu: 0.0.40
codegen_flags: <defaults>
</compile_context>

<pallas_src>
import numpy as np
import jax
import jax.numpy as jnp
from jax.experimental import pallas as pl
from jax.experimental.pallas import tpu as pltpu

NEG_SLOPE1 = 0.03    # leaky-relu slope after conv1
NEG_SLOPE2 = -0.1    # slope after conv2 (torch.where(v5>0, v5, v5*-0.1))


def fused_conv_kernel(x_ref, w1_ref, b1_ref, w2s_ref, b2_ref, t_ref, o_ref):
    # Per grid step (one batch image):
    #   x_ref  : (Cin, HW)          f32   NCHW image, spatial flattened (256 lanes)
    #   w1_ref : (C1, Cin)          f32   1x1-conv weight
    #   b1_ref : (C1, 1)            f32
    #   w2s_ref: (KH*KW*C2p, C1)    bf16  3x3-conv weight, tap-major, C2 padded
    #   b2_ref : (C2p, 1)           f32
    #   t_ref  : (KH*KW, HW, Ppad)  bf16  constant 0/1 gather matrices
    #   o_ref  : (C2p, Ppad)        f32   lane-dense padded conv2 output
    n_taps = t_ref.shape[0]
    c2p, ppad = o_ref.shape

    # ---- conv1 (1x1) + leaky-relu(0.03): channels-major f32 matmul ----------
    v1 = jnp.dot(w1_ref[...], x_ref[...], preferred_element_type=jnp.float32)
    v1 = v1 + b1_ref[...]                                        # (C1, HW)
    v4 = jnp.where(v1 > 0, v1, v1 * NEG_SLOPE1)

    # ---- conv2 (3x3, s=2, p=2): contract channels first, then MXU gather ----
    # u[k*C2p + c2, hw] = sum_c1 w2[c2, c1, kh, kw] * v4[c1, hw]
    u = jnp.dot(w2s_ref[...], v4.astype(jnp.bfloat16),
                preferred_element_type=jnp.float32)              # (9*C2p, HW)

    acc = jnp.zeros((c2p, ppad), jnp.float32)
    for k in range(n_taps):                                      # 9x, unrolled
        uk = u[k * c2p:(k + 1) * c2p, :].astype(jnp.bfloat16)    # (C2p, HW)
        # T[k] is 0/1 (exact in bf16): picks pixel (2*ho+kh-pad, 2*wo+kw-pad),
        # all-zero column when the tap falls in the zero padding.
        acc = acc + jnp.dot(uk, t_ref[k],
                            preferred_element_type=jnp.float32)  # (C2p, Ppad)

    y = acc + b2_ref[...]
    o_ref[...] = jnp.where(y > 0, y, y * NEG_SLOPE2)


def _gather_matrices(H, W, Ho, Wo, KH, KW, stride, pad, ppad):
    """Constant 0/1 gather tensor (KH*KW, H*W, ppad), built at trace time."""
    t = np.zeros((KH * KW, H * W, ppad), np.float32)
    for kh in range(KH):
        for kw in range(KW):
            k = kh * KW + kw
            for ho in range(Ho):
                h = stride * ho + kh - pad
                if not (0 <= h < H):
                    continue
                for wo in range(Wo):
                    w = stride * wo + kw - pad
                    if 0 <= w < W:
                        t[k, h * W + w, ho * Wo + wo] = 1.0
    return t


@jax.jit
def model_forward(x, w1, b1, w2, b2):
    """x: (N, 24, 16, 16) NCHW. Returns (N, 28, 9, 9) NCHW (same as torch)."""
    N, Cin, H, W = x.shape
    C1 = w1.shape[0]
    C2, _, KH, KW = w2.shape
    stride, pad = 2, 2
    Ho = (H + 2 * pad - KH) // stride + 1
    Wo = (W + 2 * pad - KW) // stride + 1
    HW, P = H * W, Ho * Wo
    PPAD = max(128, ((P + 127) // 128) * 128)        # lane-dense output width
    C2P = ((C2 + 15) // 16) * 16                     # sublane/bf16-aligned channels

    x_flat = x.reshape(N, Cin, HW)                   # free reshape, no transpose

    # Tap-major stacked conv2 weight, padded to C2P rows per tap, bf16.
    w2_taps = jnp.transpose(w2, (2, 3, 0, 1)).reshape(KH * KW, C2, C1)
    w2_taps = jnp.pad(w2_taps, ((0, 0), (0, C2P - C2), (0, 0)))
    w2s = w2_taps.reshape(KH * KW * C2P, C1).astype(jnp.bfloat16)

    b1c = b1.reshape(C1, 1)
    b2c = jnp.pad(b2, (0, C2P - C2)).reshape(C2P, 1)

    # Constant 0/1 gather tensor (~0.6 MB bf16), DMA'd once (constant index_map).
    t_gather = jnp.asarray(
        _gather_matrices(H, W, Ho, Wo, KH, KW, stride, pad, PPAD),
        dtype=jnp.bfloat16)

    out = pl.pallas_call(
        fused_conv_kernel,
        out_shape=jax.ShapeDtypeStruct((N, C2P, PPAD), jnp.float32),
        grid=(N,),
        in_specs=[
            pl.BlockSpec((None, Cin, HW), lambda n: (n, 0, 0)),
            pl.BlockSpec((C1, Cin), lambda n: (0, 0)),
            pl.BlockSpec((C1, 1), lambda n: (0, 0)),
            pl.BlockSpec((KH * KW * C2P, C1), lambda n: (0, 0)),
            pl.BlockSpec((C2P, 1), lambda n: (0, 0)),
            pl.BlockSpec((KH * KW, HW, PPAD), lambda n: (0, 0, 0)),
        ],
        out_specs=pl.BlockSpec((None, C2P, PPAD), lambda n: (n, 0, 0)),
        compiler_params=pltpu.CompilerParams(
            dimension_semantics=("parallel",)),
    )(x_flat, w1, b1c, w2s, b2c, t_gather)

    return out[:, :C2, :P].reshape(N, C2, Ho, Wo)


def reference_forward(x, w1, b1, w2, b2):
    v1 = jax.lax.conv_general_dilated(
        x, w1[:, :, None, None], window_strides=(1, 1),
        padding=((0, 0), (0, 0)),
        dimension_numbers=("NCHW", "OIHW", "NCHW"),
    ) + b1.reshape(1, -1, 1, 1)
    v4 = jnp.where(v1 > 0, v1, v1 * NEG_SLOPE1)
    v5 = jax.lax.conv_general_dilated(
        v4, w2, window_strides=(2, 2),
        padding=((2, 2), (2, 2)),
        dimension_numbers=("NCHW", "OIHW", "NCHW"),
    ) + b2.reshape(1, -1, 1, 1)
    return jnp.where(v5 > 0, v5, v5 * NEG_SLOPE2)


if __name__ == "__main__":
    key = jax.random.PRNGKey(0)
    k1, k2, k3, k4, k5 = jax.random.split(key, 5)

    # conv1: Conv2d(24, 62, 1)           -> weight (62, 24),        bias (62,)
    # conv2: Conv2d(62, 28, 3, s=2, p=2) -> weight OIHW (28,62,3,3), bias (28,)
    w1 = 0.10 * jax.random.normal(k1, (62, 24), jnp.float32)
    b1 = 0.10 * jax.random.normal(k2, (62,), jnp.float32)
    w2 = 0.05 * jax.random.normal(k3, (28, 62, 3, 3), jnp.float32)
    b2 = 0.05 * jax.random.normal(k4, (28,), jnp.float32)

    # Input (NCHW, as the PyTorch module expects): (2, 24, 16, 16)
    x = jax.random.normal(k5, (2, 24, 16, 16), jnp.float32)

    out = jax.block_until_ready(model_forward(x, w1, b1, w2, b2))
    assert out.shape == (2, 28, 9, 9), out.shape

    ref = reference_forward(x, w1, b1, w2, b2)
    err = float(jnp.max(jnp.abs(out - ref)))
    assert jnp.allclose(out, ref, rtol=2e-2, atol=2e-2), err

    print("KERNEL_OK")
</pallas_src>

<mosaic_0001>
module attributes {stable_mosaic.version = 11 : i64} {
  func.func @fused_conv_kernel(%arg0: i32, %arg1: memref<1x24x256xf32, #tpu.memory_space<vmem>>, %arg2: memref<62x24xf32, #tpu.memory_space<vmem>>, %arg3: memref<62x1xf32, #tpu.memory_space<vmem>>, %arg4: memref<288x62xbf16, #tpu.memory_space<vmem>>, %arg5: memref<32x1xf32, #tpu.memory_space<vmem>>, %arg6: memref<9x256x128xbf16, #tpu.memory_space<vmem>>, %arg7: memref<1x32x128xf32, #tpu.memory_space<vmem>>) attributes {dimension_semantics = [#tpu.dimension_semantics<parallel>], iteration_bounds = array<i64: 2>, scalar_prefetch = 0 : i64, scratch_operands = 0 : i64, tpu.core_type = #tpu.core_type<tc>, window_params = [{transform_indices = @transform_0, window_bounds = array<i64: 1, 24, 256>}, {pipeline_mode = #tpu.pipeline_mode<synchronous>, transform_indices = @transform_1, window_bounds = array<i64: 62, 24>}, {pipeline_mode = #tpu.pipeline_mode<synchronous>, transform_indices = @transform_2, window_bounds = array<i64: 62, 1>}, {pipeline_mode = #tpu.pipeline_mode<synchronous>, transform_indices = @transform_3, window_bounds = array<i64: 288, 62>}, {pipeline_mode = #tpu.pipeline_mode<synchronous>, transform_indices = @transform_4, window_bounds = array<i64: 32, 1>}, {pipeline_mode = #tpu.pipeline_mode<synchronous>, transform_indices = @transform_5, window_bounds = array<i64: 9, 256, 128>}, {transform_indices = @transform_6, window_bounds = array<i64: 1, 32, 128>}]} {
    %c0 = arith.constant 0 : index
    %c0_0 = arith.constant 0 : index
    %0 = vector.load %arg2[%c0, %c0_0] : memref<62x24xf32, #tpu.memory_space<vmem>>, vector<62x24xf32>
    %c0_1 = arith.constant 0 : index
    %c0_2 = arith.constant 0 : index
    %c0_3 = arith.constant 0 : index
    %1 = vector.load %arg1[%c0_1, %c0_2, %c0_3] : memref<1x24x256xf32, #tpu.memory_space<vmem>>, vector<1x24x256xf32>
    %2 = vector.shape_cast %1 : vector<1x24x256xf32> to vector<24x256xf32>
    %cst = arith.constant dense<0.000000e+00> : vector<62x256xf32>
    %3 = tpu.matmul %0, %2, %cst {dimension_numbers = #tpu.dot_dimension_numbers<[1], [0], [0], [1], [0, 0, 1, 1], [], []>} : vector<62x24xf32>, vector<24x256xf32>, vector<62x256xf32> -> vector<62x256xf32>
    %c0_4 = arith.constant 0 : index
    %c0_5 = arith.constant 0 : index
    %4 = vector.load %arg3[%c0_4, %c0_5] : memref<62x1xf32, #tpu.memory_space<vmem>>, vector<62x1xf32>
    %5 = vector.broadcast %4 : vector<62x1xf32> to vector<62x256xf32>
    %6 = arith.addf %3, %5 : vector<62x256xf32>
    %cst_6 = arith.constant 0.000000e+00 : f32
    %7 = vector.broadcast %cst_6 : f32 to vector<62x256xf32>
    %8 = arith.cmpf ogt, %6, %7 : vector<62x256xf32>
    %cst_7 = arith.constant 3.000000e-02 : f32
    %9 = vector.broadcast %cst_7 : f32 to vector<62x256xf32>
    %10 = arith.mulf %6, %9 : vector<62x256xf32>
    %11 = arith.select %8, %6, %10 : vector<62x256xi1>, vector<62x256xf32>
    %c0_8 = arith.constant 0 : index
    %c0_9 = arith.constant 0 : index
    %12 = vector.load %arg4[%c0_8, %c0_9] : memref<288x62xbf16, #tpu.memory_space<vmem>>, vector<288x62xbf16>
    %13 = arith.truncf %11 : vector<62x256xf32> to vector<62x256xbf16>
    %cst_10 = arith.constant dense<0.000000e+00> : vector<288x256xf32>
    %14 = tpu.matmul %12, %13, %cst_10 {dimension_numbers = #tpu.dot_dimension_numbers<[1], [0], [0], [1], [0, 0, 1, 1], [], []>} : vector<288x62xbf16>, vector<62x256xbf16>, vector<288x256xf32> -> vector<288x256xf32>
    %cst_11 = arith.constant 0.000000e+00 : f32
    %15 = vector.broadcast %cst_11 : f32 to vector<32x128xf32>
    %16 = vector.extract_strided_slice %14 {offsets = [0, 0], sizes = [32, 256], strides = [1, 1]} : vector<288x256xf32> to vector<32x256xf32>
    %17 = arith.truncf %16 : vector<32x256xf32> to vector<32x256xbf16>
    %c0_12 = arith.constant 0 : index
    %c0_13 = arith.constant 0 : index
    %c0_14 = arith.constant 0 : index
    %18 = vector.load %arg6[%c0_12, %c0_13, %c0_14] : memref<9x256x128xbf16, #tpu.memory_space<vmem>>, vector<1x256x128xbf16>
    %19 = vector.shape_cast %18 : vector<1x256x128xbf16> to vector<256x128xbf16>
    %cst_15 = arith.constant dense<0.000000e+00> : vector<32x128xf32>
    %20 = tpu.matmul %17, %19, %cst_15 {dimension_numbers = #tpu.dot_dimension_numbers<[1], [0], [0], [1], [0, 0, 1, 1], [], []>} : vector<32x256xbf16>, vector<256x128xbf16>, vector<32x128xf32> -> vector<32x128xf32>
    %21 = arith.addf %15, %20 : vector<32x128xf32>
    %22 = vector.extract_strided_slice %14 {offsets = [32, 0], sizes = [32, 256], strides = [1, 1]} : vector<288x256xf32> to vector<32x256xf32>
    %23 = arith.truncf %22 : vector<32x256xf32> to vector<32x256xbf16>
    %c1 = arith.constant 1 : index
    %c0_16 = arith.constant 0 : index
    %c0_17 = arith.constant 0 : index
    %24 = vector.load %arg6[%c1, %c0_16, %c0_17] : memref<9x256x128xbf16, #tpu.memory_space<vmem>>, vector<1x256x128xbf16>
    %25 = vector.shape_cast %24 : vector<1x256x128xbf16> to vector<256x128xbf16>
    %cst_18 = arith.constant dense<0.000000e+00> : vector<32x128xf32>
    %26 = tpu.matmul %23, %25, %cst_18 {dimension_numbers = #tpu.dot_dimension_numbers<[1], [0], [0], [1], [0, 0, 1, 1], [], []>} : vector<32x256xbf16>, vector<256x128xbf16>, vector<32x128xf32> -> vector<32x128xf32>
    %27 = arith.addf %21, %26 : vector<32x128xf32>
    %28 = vector.extract_strided_slice %14 {offsets = [64, 0], sizes = [32, 256], strides = [1, 1]} : vector<288x256xf32> to vector<32x256xf32>
    %29 = arith.truncf %28 : vector<32x256xf32> to vector<32x256xbf16>
    %c2 = arith.constant 2 : index
    %c0_19 = arith.constant 0 : index
    %c0_20 = arith.constant 0 : index
    %30 = vector.load %arg6[%c2, %c0_19, %c0_20] : memref<9x256x128xbf16, #tpu.memory_space<vmem>>, vector<1x256x128xbf16>
    %31 = vector.shape_cast %30 : vector<1x256x128xbf16> to vector<256x128xbf16>
    %cst_21 = arith.constant dense<0.000000e+00> : vector<32x128xf32>
    %32 = tpu.matmul %29, %31, %cst_21 {dimension_numbers = #tpu.dot_dimension_numbers<[1], [0], [0], [1], [0, 0, 1, 1], [], []>} : vector<32x256xbf16>, vector<256x128xbf16>, vector<32x128xf32> -> vector<32x128xf32>
    %33 = arith.addf %27, %32 : vector<32x128xf32>
    %34 = vector.extract_strided_slice %14 {offsets = [96, 0], sizes = [32, 256], strides = [1, 1]} : vector<288x256xf32> to vector<32x256xf32>
    %35 = arith.truncf %34 : vector<32x256xf32> to vector<32x256xbf16>
    %c3 = arith.constant 3 : index
    %c0_22 = arith.constant 0 : index
    %c0_23 = arith.constant 0 : index
    %36 = vector.load %arg6[%c3, %c0_22, %c0_23] : memref<9x256x128xbf16, #tpu.memory_space<vmem>>, vector<1x256x128xbf16>
    %37 = vector.shape_cast %36 : vector<1x256x128xbf16> to vector<256x128xbf16>
    %cst_24 = arith.constant dense<0.000000e+00> : vector<32x128xf32>
    %38 = tpu.matmul %35, %37, %cst_24 {dimension_numbers = #tpu.dot_dimension_numbers<[1], [0], [0], [1], [0, 0, 1, 1], [], []>} : vector<32x256xbf16>, vector<256x128xbf16>, vector<32x128xf32> -> vector<32x128xf32>
    %39 = arith.addf %33, %38 : vector<32x128xf32>
    %40 = vector.extract_strided_slice %14 {offsets = [128, 0], sizes = [32, 256], strides = [1, 1]} : vector<288x256xf32> to vector<32x256xf32>
    %41 = arith.truncf %40 : vector<32x256xf32> to vector<32x256xbf16>
    %c4 = arith.constant 4 : index
    %c0_25 = arith.constant 0 : index
    %c0_26 = arith.constant 0 : index
    %42 = vector.load %arg6[%c4, %c0_25, %c0_26] : memref<9x256x128xbf16, #tpu.memory_space<vmem>>, vector<1x256x128xbf16>
    %43 = vector.shape_cast %42 : vector<1x256x128xbf16> to vector<256x128xbf16>
    %cst_27 = arith.constant dense<0.000000e+00> : vector<32x128xf32>
    %44 = tpu.matmul %41, %43, %cst_27 {dimension_numbers = #tpu.dot_dimension_numbers<[1], [0], [0], [1], [0, 0, 1, 1], [], []>} : vector<32x256xbf16>, vector<256x128xbf16>, vector<32x128xf32> -> vector<32x128xf32>
    %45 = arith.addf %39, %44 : vector<32x128xf32>
    %46 = vector.extract_strided_slice %14 {offsets = [160, 0], sizes = [32, 256], strides = [1, 1]} : vector<288x256xf32> to vector<32x256xf32>
    %47 = arith.truncf %46 : vector<32x256xf32> to vector<32x256xbf16>
    %c5 = arith.constant 5 : index
    %c0_28 = arith.constant 0 : index
    %c0_29 = arith.constant 0 : index
    %48 = vector.load %arg6[%c5, %c0_28, %c0_29] : memref<9x256x128xbf16, #tpu.memory_space<vmem>>, vector<1x256x128xbf16>
    %49 = vector.shape_cast %48 : vector<1x256x128xbf16> to vector<256x128xbf16>
    %cst_30 = arith.constant dense<0.000000e+00> : vector<32x128xf32>
    %50 = tpu.matmul %47, %49, %cst_30 {dimension_numbers = #tpu.dot_dimension_numbers<[1], [0], [0], [1], [0, 0, 1, 1], [], []>} : vector<32x256xbf16>, vector<256x128xbf16>, vector<32x128xf32> -> vector<32x128xf32>
    %51 = arith.addf %45, %50 : vector<32x128xf32>
    %52 = vector.extract_strided_slice %14 {offsets = [192, 0], sizes = [32, 256], strides = [1, 1]} : vector<288x256xf32> to vector<32x256xf32>
    %53 = arith.truncf %52 : vector<32x256xf32> to vector<32x256xbf16>
    %c6 = arith.constant 6 : index
    %c0_31 = arith.constant 0 : index
    %c0_32 = arith.constant 0 : index
    %54 = vector.load %arg6[%c6, %c0_31, %c0_32] : memref<9x256x128xbf16, #tpu.memory_space<vmem>>, vector<1x256x128xbf16>
    %55 = vector.shape_cast %54 : vector<1x256x128xbf16> to vector<256x128xbf16>
    %cst_33 = arith.constant dense<0.000000e+00> : vector<32x128xf32>
    %56 = tpu.matmul %53, %55, %cst_33 {dimension_numbers = #tpu.dot_dimension_numbers<[1], [0], [0], [1], [0, 0, 1, 1], [], []>} : vector<32x256xbf16>, vector<256x128xbf16>, vector<32x128xf32> -> vector<32x128xf32>
    %57 = arith.addf %51, %56 : vector<32x128xf32>
    %58 = vector.extract_strided_slice %14 {offsets = [224, 0], sizes = [32, 256], strides = [1, 1]} : vector<288x256xf32> to vector<32x256xf32>
    %59 = arith.truncf %58 : vector<32x256xf32> to vector<32x256xbf16>
    %c7 = arith.constant 7 : index
    %c0_34 = arith.constant 0 : index
    %c0_35 = arith.constant 0 : index
    %60 = vector.load %arg6[%c7, %c0_34, %c0_35] : memref<9x256x128xbf16, #tpu.memory_space<vmem>>, vector<1x256x128xbf16>
    %61 = vector.shape_cast %60 : vector<1x256x128xbf16> to vector<256x128xbf16>
    %cst_36 = arith.constant dense<0.000000e+00> : vector<32x128xf32>
    %62 = tpu.matmul %59, %61, %cst_36 {dimension_numbers = #tpu.dot_dimension_numbers<[1], [0], [0], [1], [0, 0, 1, 1], [], []>} : vector<32x256xbf16>, vector<256x128xbf16>, vector<32x128xf32> -> vector<32x128xf32>
    %63 = arith.addf %57, %62 : vector<32x128xf32>
    %64 = vector.extract_strided_slice %14 {offsets = [256, 0], sizes = [32, 256], strides = [1, 1]} : vector<288x256xf32> to vector<32x256xf32>
    %65 = arith.truncf %64 : vector<32x256xf32> to vector<32x256xbf16>
    %c8 = arith.constant 8 : index
    %c0_37 = arith.constant 0 : index
    %c0_38 = arith.constant 0 : index
    %66 = vector.load %arg6[%c8, %c0_37, %c0_38] : memref<9x256x128xbf16, #tpu.memory_space<vmem>>, vector<1x256x128xbf16>
    %67 = vector.shape_cast %66 : vector<1x256x128xbf16> to vector<256x128xbf16>
    %cst_39 = arith.constant dense<0.000000e+00> : vector<32x128xf32>
    %68 = tpu.matmul %65, %67, %cst_39 {dimension_numbers = #tpu.dot_dimension_numbers<[1], [0], [0], [1], [0, 0, 1, 1], [], []>} : vector<32x256xbf16>, vector<256x128xbf16>, vector<32x128xf32> -> vector<32x128xf32>
    %69 = arith.addf %63, %68 : vector<32x128xf32>
    %c0_40 = arith.constant 0 : index
    %c0_41 = arith.constant 0 : index
    %70 = vector.load %arg5[%c0_40, %c0_41] : memref<32x1xf32, #tpu.memory_space<vmem>>, vector<32x1xf32>
    %71 = vector.broadcast %70 : vector<32x1xf32> to vector<32x128xf32>
    %72 = arith.addf %69, %71 : vector<32x128xf32>
    %cst_42 = arith.constant 0.000000e+00 : f32
    %73 = vector.broadcast %cst_42 : f32 to vector<32x128xf32>
    %74 = arith.cmpf ogt, %72, %73 : vector<32x128xf32>
    %cst_43 = arith.constant -1.000000e-01 : f32
    %75 = vector.broadcast %cst_43 : f32 to vector<32x128xf32>
    %76 = arith.mulf %72, %75 : vector<32x128xf32>
    %77 = arith.select %74, %72, %76 : vector<32x128xi1>, vector<32x128xf32>
    %c0_44 = arith.constant 0 : index
    %c0_45 = arith.constant 0 : index
    %c0_46 = arith.constant 0 : index
    %78 = vector.load %arg7[%c0_44, %c0_45, %c0_46] : memref<1x32x128xf32, #tpu.memory_space<vmem>>, vector<1x32x128xf32>
    %79 = vector.shape_cast %78 : vector<1x32x128xf32> to vector<32x128xf32>
    %80 = vector.shape_cast %77 : vector<32x128xf32> to vector<1x32x128xf32>
    tpu.vector_store %arg7[%c0_44, %c0_45, %c0_46], %80 {strides = array<i32>} : memref<1x32x128xf32, #tpu.memory_space<vmem>>, vector<1x32x128xf32>,
    return
  }
  func.func @transform_0(%arg0: i32) -> (i32, i32, i32) {
    %c0_i32 = arith.constant 0 : i32
    %c0_i32_0 = arith.constant 0 : i32
    %c0_i32_1 = arith.constant 0 : i32
    return %arg0, %c0_i32, %c0_i32_0 : i32, i32, i32
  }
  func.func @transform_1(%arg0: i32) -> (i32, i32) {
    %c0_i32 = arith.constant 0 : i32
    %c0_i32_0 = arith.constant 0 : i32
    %c0_i32_1 = arith.constant 0 : i32
    return %c0_i32, %c0_i32_0 : i32, i32
  }
  func.func @transform_2(%arg0: i32) -> (i32, i32) {
    %c0_i32 = arith.constant 0 : i32
    %c0_i32_0 = arith.constant 0 : i32
    %c0_i32_1 = arith.constant 0 : i32
    return %c0_i32, %c0_i32_0 : i32, i32
  }
  func.func @transform_3(%arg0: i32) -> (i32, i32) {
    %c0_i32 = arith.constant 0 : i32
    %c0_i32_0 = arith.constant 0 : i32
    %c0_i32_1 = arith.constant 0 : i32
    return %c0_i32, %c0_i32_0 : i32, i32
  }
  func.func @transform_4(%arg0: i32) -> (i32, i32) {
    %c0_i32 = arith.constant 0 : i32
    %c0_i32_0 = arith.constant 0 : i32
    %c0_i32_1 = arith.constant 0 : i32
    return %c0_i32, %c0_i32_0 : i32, i32
  }
  func.func @transform_5(%arg0: i32) -> (i32, i32, i32) {
    %c0_i32 = arith.constant 0 : i32
    %c0_i32_0 = arith.constant 0 : i32
    %c0_i32_1 = arith.constant 0 : i32
    %c0_i32_2 = arith.constant 0 : i32
    return %c0_i32, %c0_i32_0, %c0_i32_1 : i32, i32, i32
  }
  func.func @transform_6(%arg0: i32) -> (i32, i32, i32) {
    %c0_i32 = arith.constant 0 : i32
    %c0_i32_0 = arith.constant 0 : i32
    %c0_i32_1 = arith.constant 0 : i32
    return %arg0, %c0_i32, %c0_i32_0 : i32, i32, i32
  }
}

</mosaic_0001>

<llo_original>
// kernel: model_forward.1
$region0: #{model_forward.1}
  #allocation0 [shape = 'u32[]', space=smem, size = 0x4, offset = 0x4, fixed_abs, tag = 'smem constant byte address 0x4 - core index']
  #allocation1 [shape = 'u32[72,128]{1,0:T(1,128)}', space=vmem, size = 0x9000, scoped, tag = 'internal scratch']
  %s0 = inlined_call_operand.vmem [shape: f32[2,24,256], index: 0, kind: input, shape index: {}]
  %s1 = inlined_call_operand.vmem [shape: f32[62,24], index: 1, kind: input, shape index: {}]
  %s2 = inlined_call_operand.vmem [shape: f32[62,1], index: 2, kind: input, shape index: {}]
  %s3 = inlined_call_operand.vmem [shape: bf16[288,62], index: 3, kind: input, shape index: {}]
  %s4 = inlined_call_operand.vmem [shape: f32[32,1], index: 4, kind: input, shape index: {}]
  %s5 = inlined_call_operand.hbm [shape: bf16[9,256,128], index: 5, kind: input, shape index: {}]
  %s6 = inlined_call_operand.vmem [shape: f32[2,32,128], index: 6, kind: output, shape index: {}]
  %s7 = sld [smem:[#allocation0]]
  $region61: #{model_forward.1} parent=0
    _
  %s9 = ssub.s32 1, %s7
  %s10 = scalar_select 0, %s9, %s7
  $region1: #{model_forward.1} parent=0
    #allocation2 [shape = 'u8[589824]{0}', space=vmem, size = 0x90000, scoped, tag = 'input window, operand 5, single buffered']
    #allocation3 [shape = 's32[2]{0}', space=sflag, size = 0x8, scoped, tag = 'scoped memory for model_forward.1']
    %11 = vsyncpa [#allocation3], 0
    loop: start=0, step=1, limit=4
    $region2: #{model_forward.1} parent=1 // loop_pre_header
      _
    $region3: #{model_forward.1} parent=1 // loop_header
      %s13 = sphi 0, %s17
      %p14 = scmp.ge.s32.totalorder %s13, 4
      %s23 = sphi 0, %s25
      %s26 = sphi 0, %s23
      %s27 = sphi 0, %s26
      %s43 = sphi 0, %s27
      %s47 = sphi 0, %s47
      %s49 = sphi 0, %s47
      %s50 = sphi 0, %s49
      %s64 = sphi 0, %s50
      %s68 = sphi 0, %s68
      %s70 = sphi 0, %s68
      %s71 = sphi 0, %s70
      %s85 = sphi 0, %s71
      %s89 = sphi 0, %s89
      %s91 = sphi 0, %s89
      %s92 = sphi 0, %s91
      %s106 = sphi 0, %s92
      %s110 = sphi 0, %s110
      %s112 = sphi 0, %s110
      %s113 = sphi 0, %s112
      %s127 = sphi 0, %s113
      %s131 = sphi 0, %s131
      %s133 = sphi 0, %s131
      %s134 = sphi 0, %s133
      %s148 = sphi 0, %s134
      %s154 = sphi 0, %s156
      %s157 = sphi 0, %s154
      %s158 = sphi 0, %s157
      %s174 = sphi 0, %s158
    $region4: #{model_forward.1} parent=1 // loop_header_branch
      %16 = sbr.rel (%p14) target = $region8
    $region5: #{model_forward.1} parent=1 // loop_body
      %s18 = ssub.s32 %s13, 1
      %s19 = ssub.s32 %s13, 2
      %s20 = sadd.s32 %s13, 1
      %s21 = ssub.s32 %s13, %s20
      %p22 = scmp.eq.s32.totalorder %s21, 0
      %s24 = sadd.s32 %s23, 1
      %s25 = scalar_select %p22, %s23, %s24
      %p28 = pneg %p22
      %p29 = scmp.eq.s32.totalorder %s13, 1
      %p30 = por %p28, %p29
      %p31 = scmp.ne.s32.totalorder %s23, %s26
      %p32 = scmp.eq.s32.totalorder %s13, 0
      %p33 = por %p31, %p32
      %p34 = scmp.ne.s32.totalorder %s23, %s26
      %p35 = scmp.eq.s32.totalorder %s18, 1
      %p36 = por %p34, %p35
      %p37 = scmp.ne.s32.totalorder %s26, %s27
      %p38 = scmp.eq.s32.totalorder %s18, 0
      %p39 = por %p37, %p38
      %p40 = scmp.ne.s32.totalorder %s26, %s27
      %p41 = scmp.eq.s32.totalorder %s19, 1
      %p42 = por %p40, %p41
      %p44 = scmp.ne.s32.totalorder %s27, %s43
      %p45 = scmp.eq.s32.totalorder %s19, 0
      %p46 = por %p44, %p45
      %s48 = sadd.s32 %s47, 1
      %p51 = scmp.eq.s32.totalorder %s13, 1
      %p52 = scmp.ne.s32.totalorder %s47, %s49
      %p53 = scmp.eq.s32.totalorder %s13, 0
      %p54 = por %p52, %p53
      %p55 = scmp.ne.s32.totalorder %s47, %s49
      %p56 = scmp.eq.s32.totalorder %s18, 1
      %p57 = por %p55, %p56
      %p58 = scmp.ne.s32.totalorder %s49, %s50
      %p59 = scmp.eq.s32.totalorder %s18, 0
      %p60 = por %p58, %p59
      %p61 = scmp.ne.s32.totalorder %s49, %s50
      %p62 = scmp.eq.s32.totalorder %s19, 1
      %p63 = por %p61, %p62
      %p65 = scmp.ne.s32.totalorder %s50, %s64
      %p66 = scmp.eq.s32.totalorder %s19, 0
      %p67 = por %p65, %p66
      %s69 = sadd.s32 %s68, 1
      %p72 = scmp.eq.s32.totalorder %s13, 1
      %p73 = scmp.ne.s32.totalorder %s68, %s70
      %p74 = scmp.eq.s32.totalorder %s13, 0
      %p75 = por %p73, %p74
      %p76 = scmp.ne.s32.totalorder %s68, %s70
      %p77 = scmp.eq.s32.totalorder %s18, 1
      %p78 = por %p76, %p77
      %p79 = scmp.ne.s32.totalorder %s70, %s71
      %p80 = scmp.eq.s32.totalorder %s18, 0
      %p81 = por %p79, %p80
      %p82 = scmp.ne.s32.totalorder %s70, %s71
      %p83 = scmp.eq.s32.totalorder %s19, 1
      %p84 = por %p82, %p83
      %p86 = scmp.ne.s32.totalorder %s71, %s85
      %p87 = scmp.eq.s32.totalorder %s19, 0
      %p88 = por %p86, %p87
      %s90 = sadd.s32 %s89, 1
      %p93 = scmp.eq.s32.totalorder %s13, 1
      %p94 = scmp.ne.s32.totalorder %s89, %s91
      %p95 = scmp.eq.s32.totalorder %s13, 0
      %p96 = por %p94, %p95
      %p97 = scmp.ne.s32.totalorder %s89, %s91
      %p98 = scmp.eq.s32.totalorder %s18, 1
      %p99 = por %p97, %p98
      %p100 = scmp.ne.s32.totalorder %s91, %s92
      %p101 = scmp.eq.s32.totalorder %s18, 0
      %p102 = por %p100, %p101
      %p103 = scmp.ne.s32.totalorder %s91, %s92
      %p104 = scmp.eq.s32.totalorder %s19, 1
      %p105 = por %p103, %p104
      %p107 = scmp.ne.s32.totalorder %s92, %s106
      %p108 = scmp.eq.s32.totalorder %s19, 0
      %p109 = por %p107, %p108
      %s111 = sadd.s32 %s110, 1
      %p114 = scmp.eq.s32.totalorder %s13, 1
      %p115 = scmp.ne.s32.totalorder %s110, %s112
      %p116 = scmp.eq.s32.totalorder %s13, 0
      %p117 = por %p115, %p116
      %p118 = scmp.ne.s32.totalorder %s110, %s112
      %p119 = scmp.eq.s32.totalorder %s18, 1
      %p120 = por %p118, %p119
      %p121 = scmp.ne.s32.totalorder %s112, %s113
      %p122 = scmp.eq.s32.totalorder %s18, 0
      %p123 = por %p121, %p122
      %p124 = scmp.ne.s32.totalorder %s112, %s113
      %p125 = scmp.eq.s32.totalorder %s19, 1
      %p126 = por %p124, %p125
      %p128 = scmp.ne.s32.totalorder %s113, %s127
      %p129 = scmp.eq.s32.totalorder %s19, 0
      %p130 = por %p128, %p129
      %s132 = sadd.s32 %s131, 1
      %p135 = scmp.eq.s32.totalorder %s13, 1
      %p136 = scmp.ne.s32.totalorder %s131, %s133
      %p137 = scmp.eq.s32.totalorder %s13, 0
      %p138 = por %p136, %p137
      %p139 = scmp.ne.s32.totalorder %s131, %s133
      %p140 = scmp.eq.s32.totalorder %s18, 1
      %p141 = por %p139, %p140
      %p142 = scmp.ne.s32.totalorder %s133, %s134
      %p143 = scmp.eq.s32.totalorder %s18, 0
      %p144 = por %p142, %p143
      %p145 = scmp.ne.s32.totalorder %s133, %s134
      %p146 = scmp.eq.s32.totalorder %s19, 1
      %p147 = por %p145, %p146
      %p149 = scmp.ne.s32.totalorder %s134, %s148
      %p150 = scmp.eq.s32.totalorder %s19, 0
      %p151 = por %p149, %p150
      %s152 = ssub.s32 %s13, %s20
      %p153 = scmp.eq.s32.totalorder %s152, 0
      %s155 = sadd.s32 %s154, 1
      %s156 = scalar_select %p153, %s154, %s155
      %p159 = pneg %p153
      %p160 = scmp.eq.s32.totalorder %s13, 1
      %p161 = por %p159, %p160
      %p162 = scmp.ne.s32.totalorder %s154, %s157
      %p163 = scmp.eq.s32.totalorder %s13, 0
      %p164 = por %p162, %p163
      %p165 = scmp.ne.s32.totalorder %s154, %s157
      %p166 = scmp.eq.s32.totalorder %s18, 1
      %p167 = por %p165, %p166
      %p168 = scmp.ne.s32.totalorder %s157, %s158
      %p169 = scmp.eq.s32.totalorder %s18, 0
      %p170 = por %p168, %p169
      %p171 = scmp.ne.s32.totalorder %s157, %s158
      %p172 = scmp.eq.s32.totalorder %s19, 1
      %p173 = por %p171, %p172
      %p175 = scmp.ne.s32.totalorder %s158, %s174
      %p176 = scmp.eq.s32.totalorder %s19, 0
      %p177 = por %p175, %p176
      %p178 = scmp.le.s32.totalorder 1, %s13
      %p179 = scmp.lt.s32.totalorder %s13, 3
      %p180 = pnand %p178, %p179
      %p181 = pneg %p180
      // Predicated region
      $region9: #{model_forward.1} parent=5 // pred_check
        _
      $region10: #{model_forward.1} parent=5 // pred_check_branch
        %183 = sbr.rel (%p180) target = $region12
      $region11: #{model_forward.1} parent=5 // pred_region
        %s184 = ssub.s32 %s13, 1
        // Predicated region
        $region13: #{model_forward.1} parent=11 // pred_check
          %p185 = pneg %p60
        $region14: #{model_forward.1} parent=11 // pred_check_branch
          %187 = sbr.rel (%p185) target = $region16
        $region15: #{model_forward.1} parent=11 // pred_region
          _
        $region16: #{model_forward.1} parent=11 // pred_fallthru
          _
        // Predicated region
        $region17: #{model_forward.1} parent=11 // pred_check
          %p188 = pneg %p81
        $region18: #{model_forward.1} parent=11 // pred_check_branch
          %190 = sbr.rel (%p188) target = $region20
        $region19: #{model_forward.1} parent=11 // pred_region
          _
        $region20: #{model_forward.1} parent=11 // pred_fallthru
          _
        // Predicated region
        $region21: #{model_forward.1} parent=11 // pred_check
          %p191 = pneg %p102
        $region22: #{model_forward.1} parent=11 // pred_check_branch
          %193 = sbr.rel (%p191) target = $region24
        $region23: #{model_forward.1} parent=11 // pred_region
          _
        $region24: #{model_forward.1} parent=11 // pred_fallthru
          _
        // Predicated region
        $region25: #{model_forward.1} parent=11 // pred_check
          %p194 = pneg %p123
        $region26: #{model_forward.1} parent=11 // pred_check_branch
          %196 = sbr.rel (%p194) target = $region28
        $region27: #{model_forward.1} parent=11 // pred_region
          _
        $region28: #{model_forward.1} parent=11 // pred_fallthru
          _
        // Predicated region
        $region29: #{model_forward.1} parent=11 // pred_check
          %p197 = pneg %p144
        $region30: #{model_forward.1} parent=11 // pred_check_branch
          %199 = sbr.rel (%p197) target = $region32
        $region31: #{model_forward.1} parent=11 // pred_region
          %201 = vsyncadd [#allocation3], 0
          %s202 = sshll.u32 %s5, 4
          %s203 = int_to_ptr.hbm [resolvable:$true] %s202
          %s204 = sshll.u32 [#allocation2], 4
          %s205 = int_to_ptr.vmem [resolvable:$true] %s204
          %210 = dma.hbm_to_vmem [thread:$0]  %s203, 18432, %s205, [#allocation3], 64, 64, 4
        $region32: #{model_forward.1} parent=11 // pred_fallthru
          _
      $region12: #{model_forward.1} parent=5 // pred_fallthru
        _
      %p211 = scmp.lt.s32.totalorder %s13, 2
      // Predicated region
      $region33: #{model_forward.1} parent=5 // pred_check
        %p212 = pneg %p211
      $region34: #{model_forward.1} parent=5 // pred_check_branch
        %214 = sbr.rel (%p212) target = $region36
      $region35: #{model_forward.1} parent=5 // pred_region
        // Predicated region
        $region37: #{model_forward.1} parent=35 // pred_check
          %p215 = pneg %p33
        $region38: #{model_forward.1} parent=35 // pred_check_branch
          %217 = sbr.rel (%p215) target = $region40
        $region39: #{model_forward.1} parent=35 // pred_region
          %p218 = scmp.lt.s32.totalorder %s13, 1
          %s219 = scalar_select %p218, %s13, 1
          %s220 = smul.addr %s219, 6
          %s221 = smul.addr %s220, 8
          %s222 = scalar_lea.vmem %s0, %s221
        $region40: #{model_forward.1} parent=35 // pred_fallthru
          _
      $region36: #{model_forward.1} parent=5 // pred_fallthru
        _
      %p223 = scmp.le.s32.totalorder 1, %s13
      %p224 = scmp.lt.s32.totalorder %s13, 3
      %p225 = pnand %p223, %p224
      %p226 = pneg %p225
      // Predicated region
      $region41: #{model_forward.1} parent=5 // pred_check
        _
      $region42: #{model_forward.1} parent=5 // pred_check_branch
        %228 = sbr.rel (%p225) target = $region44
      $region43: #{model_forward.1} parent=5 // pred_region
        %s229 = ssub.s32 %s13, 1
        // Predicated region
        $region45: #{model_forward.1} parent=43 // pred_check
          %p230 = pneg %p144
        $region46: #{model_forward.1} parent=43 // pred_check_branch
          %232 = sbr.rel (%p230) target = $region48
        $region47: #{model_forward.1} parent=43 // pred_region
          %234 = dma.done [#allocation3], 18432
        $region48: #{model_forward.1} parent=43 // pred_fallthru
          _
        %p235 = scmp.lt.s32.totalorder %s18, 1
        %s236 = scalar_select %p235, %s18, 1
        %s237 = smul.addr %s236, 6
        %s238 = smul.addr %s237, 8
        %s239 = scalar_lea.vmem %s0, %s238
        %p240 = pneg %p39
        %p241 = pneg %p36
        %p242 = pneg %p60
        %p243 = pneg %p57
        %p244 = pneg %p81
        %p245 = pneg %p78
        %p246 = pneg %p102
        %p247 = pneg %p99
        %p248 = pneg %p123
        %p249 = pneg %p120
        %p250 = pneg %p144
        %p251 = pneg %p141
        %p252 = pneg %p170
        %p253 = pneg %p167
        %p254 = scmp.lt.s32.totalorder %s18, 1
        %s255 = scalar_select %p254, %s18, 1
        %s256 = smul.addr %s255, 4
        %s257 = smul.addr %s256, 8
        %s258 = scalar_lea.vmem %s6, %s257
        %p259 = scmp.lt.s32.totalorder %s18, 1
        %s260 = scalar_select %p259, %s18, 1
        %s261 = smul.addr %s260, 6
        %s262 = smul.addr %s261, 8
        %s263 = scalar_lea.vmem %s0, %s262
        %p264 = scmp.lt.s32.totalorder %s18, 1
        %s265 = scalar_select %p264, %s18, 1
        %s266 = smul.addr %s265, 4
        %s267 = smul.addr %s266, 8
        %s268 = scalar_lea.vmem %s6, %s267
        %v270 = vld [vmem:[%s1] sm:$0xff]
        %v271 = vld [vmem:[%s1 + $0x8] sm:$0xff]
        %v272 = vld [vmem:[%s1 + $0x10] sm:$0xff]
        %v273 = vld [vmem:[%s1 + $0x18] sm:$0xff]
        %v274 = vld [vmem:[%s1 + $0x20] sm:$0xff]
        %v275 = vld [vmem:[%s1 + $0x28] sm:$0xff]
        %v276 = vld [vmem:[%s1 + $0x30] sm:$0xff]
        %v277 = vld [vmem:[%s1 + $0x38] sm:$0x3f]
        %v278 = vld [vmem:[%s263] sm:$0xff]
        %v279 = vld [vmem:[%s263 + $0x8] sm:$0xff]
        %v280 = vld [vmem:[%s263 + $0x10] sm:$0xff]
        %v281 = vld [vmem:[%s263 + $0x18] sm:$0xff]
        %v282 = vld [vmem:[%s263 + $0x20] sm:$0xff]
        %v283 = vld [vmem:[%s263 + $0x28] sm:$0xff]
        %v284 = vld [vmem:[%s2] sm:$0xff]
        %v285 = vld [vmem:[%s2 + $0x8] sm:$0xff]
        %v286 = vld [vmem:[%s2 + $0x10] sm:$0xff]
        %v287 = vld [vmem:[%s2 + $0x18] sm:$0xff]
        %v288 = vld [vmem:[%s2 + $0x20] sm:$0xff]
        %v289 = vld [vmem:[%s2 + $0x28] sm:$0xff]
        %v290 = vld [vmem:[%s2 + $0x30] sm:$0xff]
        %v291 = vld [vmem:[%s2 + $0x38] sm:$0x3f]
        %293 = vset.pattern.permute.xlu0 0
        %294 = vperm.xlu0 %293, %v284
        %v295 = vpop.permute.xlu0 %294
        %298 = vset.pattern.permute.xlu0 0
        %299 = vperm.xlu0 %298, %v285
        %v300 = vpop.permute.xlu0 %299
        %303 = vset.pattern.permute.xlu0 0
        %304 = vperm.xlu0 %303, %v286
        %v305 = vpop.permute.xlu0 %304
        %308 = vset.pattern.permute.xlu0 0
        %309 = vperm.xlu0 %308, %v287
        %v310 = vpop.permute.xlu0 %309
        %313 = vset.pattern.permute.xlu0 0
        %314 = vperm.xlu0 %313, %v288
        %v315 = vpop.permute.xlu0 %314
        %318 = vset.pattern.permute.xlu0 0
        %319 = vperm.xlu0 %318, %v289
        %v320 = vpop.permute.xlu0 %319
        %323 = vset.pattern.permute.xlu0 0
        %324 = vperm.xlu0 %323, %v290
        %v325 = vpop.permute.xlu0 %324
        %328 = vset.pattern.permute.xlu0 0
        %329 = vperm.xlu0 %328, %v291
        %v330 = vpop.permute.xlu0 %329
        %vm332 = vcmask 195584
        %v334 = vsel %vm332, %v270, 0
        %v337 = vsel %vm332, %v271, 0
        %v340 = vsel %vm332, %v272, 0
        %v343 = vsel %vm332, %v273, 0
        %v346 = vsel %vm332, %v274, 0
        %v349 = vsel %vm332, %v275, 0
        %v352 = vsel %vm332, %v276, 0
        %v355 = vsel %vm332, %v277, 0
        %357 = vmatpush.msra.mxu0 0.0
        %358 = vmatpush.msra.mxu0 0.0
        %359 = vmatpush.msra.mxu0 0.0
        %360 = vmatpush.msra.mxu0 0.0
        %361 = vmatpush.msra.mxu0 0.0
        %362 = vmatpush.msra.mxu0 0.0
        %363 = vmatpush.msra.mxu0 0.0
        %364 = vmatpush.msra.mxu0 0.0
        %365 = vmatpush.msra.mxu0 0.0
        %366 = vmatpush.msra.mxu0 0.0
        %367 = vmatpush.msra.mxu0 0.0
        %368 = vmatpush.msra.mxu0 0.0
        %369 = vmatpush.msra.mxu0 0.0
        %370 = vmatpush.msra.mxu0 %v282
        %371 = vmatpush.msra.mxu0 %v280
        %372 = vmatpush.msra.mxu0 %v278
        %373 = vmatmul.f32.gmra.mxu0 %v334
        %v374 = vpop.f32.mrf.mxu0
        %v375 = vadd.f32 %v295, %v374
        %376 = vmatmul.f32.gmra.mxu0 %v337
        %v377 = vpop.f32.mrf.mxu0
        %v378 = vadd.f32 %v300, %v377
        %379 = vmatmul.f32.gmra.mxu0 %v340
        %v380 = vpop.f32.mrf.mxu0
        %v381 = vadd.f32 %v305, %v380
        %382 = vmatmul.f32.gmra.mxu0 %v343
        %v383 = vpop.f32.mrf.mxu0
        %v384 = vadd.f32 %v310, %v383
        %385 = vmatmul.f32.gmra.mxu0 %v346
        %v386 = vpop.f32.mrf.mxu0
        %v387 = vadd.f32 %v315, %v386
        %388 = vmatmul.f32.gmra.mxu0 %v349
        %v389 = vpop.f32.mrf.mxu0
        %v390 = vadd.f32 %v320, %v389
        %391 = vmatmul.f32.gmra.mxu0 %v352
        %v392 = vpop.f32.mrf.mxu0
        %v393 = vadd.f32 %v325, %v392
        %394 = vmatmul.f32.gmra.mxu0 %v355
        %v395 = vpop.f32.mrf.mxu0
        %v396 = vadd.f32 %v330, %v395
        %397 = vdwg.mxu0
        %398 = vmatpush.msra.mxu0 0.0
        %399 = vmatpush.msra.mxu0 0.0
        %400 = vmatpush.msra.mxu0 0.0
        %401 = vmatpush.msra.mxu0 0.0
        %402 = vmatpush.msra.mxu0 0.0
        %403 = vmatpush.msra.mxu0 0.0
        %404 = vmatpush.msra.mxu0 0.0
        %405 = vmatpush.msra.mxu0 0.0
        %406 = vmatpush.msra.mxu0 0.0
        %407 = vmatpush.msra.mxu0 0.0
        %408 = vmatpush.msra.mxu0 0.0
        %409 = vmatpush.msra.mxu0 0.0
        %410 = vmatpush.msra.mxu0 0.0
        %411 = vmatpush.msra.mxu0 %v283
        %412 = vmatpush.msra.mxu0 %v281
        %413 = vmatpush.msra.mxu0 %v279
        %414 = vmatmul.f32.gmra.mxu0 %v334
        %v415 = vpop.f32.mrf.mxu0
        %v416 = vadd.f32 %v295, %v415
        %417 = vmatmul.f32.gmra.mxu0 %v337
        %v418 = vpop.f32.mrf.mxu0
        %v419 = vadd.f32 %v300, %v418
        %420 = vmatmul.f32.gmra.mxu0 %v340
        %v421 = vpop.f32.mrf.mxu0
        %v422 = vadd.f32 %v305, %v421
        %423 = vmatmul.f32.gmra.mxu0 %v343
        %v424 = vpop.f32.mrf.mxu0
        %v425 = vadd.f32 %v310, %v424
        %426 = vmatmul.f32.gmra.mxu0 %v346
        %v427 = vpop.f32.mrf.mxu0
        %v428 = vadd.f32 %v315, %v427
        %429 = vmatmul.f32.gmra.mxu0 %v349
        %v430 = vpop.f32.mrf.mxu0
        %v431 = vadd.f32 %v320, %v430
        %432 = vmatmul.f32.gmra.mxu0 %v352
        %v433 = vpop.f32.mrf.mxu0
        %v434 = vadd.f32 %v325, %v433
        %435 = vmatmul.f32.gmra.mxu0 %v355
        %v436 = vpop.f32.mrf.mxu0
        %v437 = vadd.f32 %v330, %v436
        %438 = vdwg.mxu0
        %vm439 = vcmp.gt.f32.partialorder %v375, 0.0
        %vm440 = vcmp.gt.f32.partialorder %v416, 0.0
        %vm441 = vcmp.gt.f32.partialorder %v378, 0.0
        %vm442 = vcmp.gt.f32.partialorder %v419, 0.0
        %vm443 = vcmp.gt.f32.partialorder %v381, 0.0
        %vm444 = vcmp.gt.f32.partialorder %v422, 0.0
        %vm445 = vcmp.gt.f32.partialorder %v384, 0.0
        %vm446 = vcmp.gt.f32.partialorder %v425, 0.0
        %vm447 = vcmp.gt.f32.partialorder %v387, 0.0
        %vm448 = vcmp.gt.f32.partialorder %v428, 0.0
        %vm449 = vcmp.gt.f32.partialorder %v390, 0.0
        %vm450 = vcmp.gt.f32.partialorder %v431, 0.0
        %vm451 = vcmp.gt.f32.partialorder %v393, 0.0
        %vm452 = vcmp.gt.f32.partialorder %v434, 0.0
        %vm453 = vcmp.gt.f32.partialorder %v396, 0.0
        %vm454 = vcmp.gt.f32.partialorder %v437, 0.0
        %v455 = vmul.f32 %v375, 0.03
        %v456 = vmul.f32 %v416, 0.03
        %v457 = vmul.f32 %v378, 0.03
        %v458 = vmul.f32 %v419, 0.03
        %v459 = vmul.f32 %v381, 0.03
        %v460 = vmul.f32 %v422, 0.03
        %v461 = vmul.f32 %v384, 0.03
        %v462 = vmul.f32 %v425, 0.03
        %v463 = vmul.f32 %v387, 0.03
        %v464 = vmul.f32 %v428, 0.03
        %v465 = vmul.f32 %v390, 0.03
        %v466 = vmul.f32 %v431, 0.03
        %v467 = vmul.f32 %v393, 0.03
        %v468 = vmul.f32 %v434, 0.03
        %v469 = vmul.f32 %v396, 0.03
        %v470 = vmul.f32 %v437, 0.03
        %v471 = vsel %vm439, %v375, %v455
        %v472 = vsel %vm440, %v416, %v456
        %v473 = vsel %vm441, %v378, %v457
        %v474 = vsel %vm442, %v419, %v458
        %v475 = vsel %vm443, %v381, %v459
        %v476 = vsel %vm444, %v422, %v460
        %v477 = vsel %vm445, %v384, %v461
        %v478 = vsel %vm446, %v425, %v462
        %v479 = vsel %vm447, %v387, %v463
        %v480 = vsel %vm448, %v428, %v464
        %v481 = vsel %vm449, %v390, %v465
        %v482 = vsel %vm450, %v431, %v466
        %v483 = vsel %vm451, %v393, %v467
        %v484 = vsel %vm452, %v434, %v468
        %v485 = vsel %vm453, %v396, %v469
        %v486 = vsel %vm454, %v437, %v470
        %v487 = vld [vmem:[%s3] sm:$0xf]
        %v488 = vld [vmem:[%s3 + $0x4] sm:$0xf]
        %v489 = vld [vmem:[%s3 + $0x8] sm:$0xf]
        %v490 = vld [vmem:[%s3 + $0xc] sm:$0xf]
        %v491 = vld [vmem:[%s3 + $0x10] sm:$0xf]
        %v492 = vld [vmem:[%s3 + $0x14] sm:$0xf]
        %v493 = vld [vmem:[%s3 + $0x18] sm:$0xf]
        %v494 = vld [vmem:[%s3 + $0x1c] sm:$0xf]
        %v495 = vld [vmem:[%s3 + $0x20] sm:$0xf]
        %v496 = vld [vmem:[%s3 + $0x24] sm:$0xf]
        %v497 = vld [vmem:[%s3 + $0x28] sm:$0xf]
        %v498 = vld [vmem:[%s3 + $0x2c] sm:$0xf]
        %v499 = vld [vmem:[%s3 + $0x30] sm:$0xf]
        %v500 = vld [vmem:[%s3 + $0x34] sm:$0xf]
        %v501 = vld [vmem:[%s3 + $0x38] sm:$0xf]
        %v502 = vld [vmem:[%s3 + $0x3c] sm:$0xf]
        %v503 = vld [vmem:[%s3 + $0x40] sm:$0xf]
        %v504 = vld [vmem:[%s3 + $0x44] sm:$0xf]
        %v505 = vld [vmem:[%s3 + $0x48] sm:$0xf]
        %v506 = vld [vmem:[%s3 + $0x4c] sm:$0xf]
        %v507 = vld [vmem:[%s3 + $0x50] sm:$0xf]
        %v508 = vld [vmem:[%s3 + $0x54] sm:$0xf]
        %v509 = vld [vmem:[%s3 + $0x58] sm:$0xf]
        %v510 = vld [vmem:[%s3 + $0x5c] sm:$0xf]
        %v511 = vld [vmem:[%s3 + $0x60] sm:$0xf]
        %v512 = vld [vmem:[%s3 + $0x64] sm:$0xf]
        %v513 = vld [vmem:[%s3 + $0x68] sm:$0xf]
        %v514 = vld [vmem:[%s3 + $0x6c] sm:$0xf]
        %v515 = vld [vmem:[%s3 + $0x70] sm:$0xf]
        %v516 = vld [vmem:[%s3 + $0x74] sm:$0xf]
        %v517 = vld [vmem:[%s3 + $0x78] sm:$0xf]
        %v518 = vld [vmem:[%s3 + $0x7c] sm:$0xf]
        %v519 = vld [vmem:[%s3 + $0x80] sm:$0xf]
        %v520 = vld [vmem:[%s3 + $0x84] sm:$0xf]
        %v521 = vld [vmem:[%s3 + $0x88] sm:$0xf]
        %v522 = vld [vmem:[%s3 + $0x8c] sm:$0xf]
        %v523 = vpack.c.bf16 %v473, %v471
        %v524 = vpack.c.bf16 %v474, %v472
        %v525 = vpack.c.bf16 %v477, %v475
        %v526 = vpack.c.bf16 %v478, %v476
        %v527 = vpack.c.bf16 %v481, %v479
        %v528 = vpack.c.bf16 %v482, %v480
        %v529 = vpack.c.bf16 %v485, %v483
        %v530 = vpack.c.bf16 %v486, %v484
        %v567 = vunpack.c.l.b16 %v487
        %v568 = vunpack.c.l.b16 %v488
        %v569 = vunpack.c.l.b16 %v489
        %v570 = vunpack.c.l.b16 %v490
        %v571 = vunpack.c.l.b16 %v491
        %v572 = vunpack.c.l.b16 %v492
        %v573 = vunpack.c.l.b16 %v493
        %v574 = vunpack.c.l.b16 %v494
        %v575 = vunpack.c.l.b16 %v495
        %v576 = vunpack.c.l.b16 %v496
        %v577 = vunpack.c.l.b16 %v497
        %v578 = vunpack.c.l.b16 %v498
        %v579 = vunpack.c.l.b16 %v499
        %v580 = vunpack.c.l.b16 %v500
        %v581 = vunpack.c.l.b16 %v501
        %v582 = vunpack.c.l.b16 %v502
        %v583 = vunpack.c.l.b16 %v503
        %v584 = vunpack.c.l.b16 %v504
        %v585 = vunpack.c.l.b16 %v505
        %v586 = vunpack.c.l.b16 %v506
        %v587 = vunpack.c.l.b16 %v507
        %v588 = vunpack.c.l.b16 %v508
        %v589 = vunpack.c.l.b16 %v509
        %v590 = vunpack.c.l.b16 %v510
        %v591 = vunpack.c.l.b16 %v511
        %v592 = vunpack.c.l.b16 %v512
        %v593 = vunpack.c.l.b16 %v513
        %v594 = vunpack.c.l.b16 %v514
        %v595 = vunpack.c.l.b16 %v515
        %v596 = vunpack.c.l.b16 %v516
        %v597 = vunpack.c.l.b16 %v517
        %v598 = vunpack.c.l.b16 %v518
        %v599 = vunpack.c.l.b16 %v519
        %v600 = vunpack.c.l.b16 %v520
        %v601 = vunpack.c.l.b16 %v521
        %v602 = vunpack.c.l.b16 %v522
        %v603 = vpack.c.b16 %v568, %v567
        %v604 = vpack.c.b16 %v570, %v569
        %v605 = vpack.c.b16 %v572, %v571
        %v606 = vpack.c.b16 %v574, %v573
        %v607 = vpack.c.b16 %v576, %v575
        %v608 = vpack.c.b16 %v578, %v577
        %v609 = vpack.c.b16 %v580, %v579
        %v610 = vpack.c.b16 %v582, %v581
        %v611 = vpack.c.b16 %v584, %v583
        %v612 = vpack.c.b16 %v586, %v585
        %v613 = vpack.c.b16 %v588, %v587
        %v614 = vpack.c.b16 %v590, %v589
        %v615 = vpack.c.b16 %v592, %v591
        %v616 = vpack.c.b16 %v594, %v593
        %v617 = vpack.c.b16 %v596, %v595
        %v618 = vpack.c.b16 %v598, %v597
        %v619 = vpack.c.b16 %v600, %v599
        %v620 = vpack.c.b16 %v602, %v601
        %vm621 = vcmask 506880
        %v623 = vsel %vm621, %v603, 0
        %v626 = vsel %vm621, %v604, 0
        %v629 = vsel %vm621, %v605, 0
        %v632 = vsel %vm621, %v606, 0
        %v635 = vsel %vm621, %v607, 0
        %v638 = vsel %vm621, %v608, 0
        %v641 = vsel %vm621, %v609, 0
        %v644 = vsel %vm621, %v610, 0
        %v647 = vsel %vm621, %v611, 0
        %v650 = vsel %vm621, %v612, 0
        %v653 = vsel %vm621, %v613, 0
        %v656 = vsel %vm621, %v614, 0
        %v659 = vsel %vm621, %v615, 0
        %v662 = vsel %vm621, %v616, 0
        %v665 = vsel %vm621, %v617, 0
        %v668 = vsel %vm621, %v618, 0
        %v671 = vsel %vm621, %v619, 0
        %v674 = vsel %vm621, %v620, 0
        %vm676 = vcmask 1046528
        %v678 = vsel %vm676, %v529, 0
        %v681 = vsel %vm676, %v530, 0
        %683 = vmatpush.bf16.msra.mxu0 0
        %684 = vmatpush.bf16.msra.mxu0 0
        %685 = vmatpush.bf16.msra.mxu0 0
        %686 = vmatpush.bf16.msra.mxu0 0
        %687 = vmatpush.bf16.msra.mxu0 %v678
        %688 = vmatpush.bf16.msra.mxu0 %v527
        %689 = vmatpush.bf16.msra.mxu0 %v525
        %690 = vmatpush.bf16.msra.mxu0 %v523
        %691 = vmatmul.bf16.gmra.mxu0 %v623
        %v692 = vpop.f32.mrf.mxu0
        %v693 = vadd.f32 0.0, %v692
        %v694 = vpop.f32.mrf.mxu0
        %v695 = vadd.f32 0.0, %v694
        %696 = vmatmul.bf16.gmra.mxu0 %v626
        %v697 = vpop.f32.mrf.mxu0
        %v698 = vadd.f32 0.0, %v697
        %v699 = vpop.f32.mrf.mxu0
        %v700 = vadd.f32 0.0, %v699
        %701 = vmatmul.bf16.gmra.mxu0 %v629
        %v702 = vpop.f32.mrf.mxu0
        %v703 = vadd.f32 0.0, %v702
        %v704 = vpop.f32.mrf.mxu0
        %v705 = vadd.f32 0.0, %v704
        %706 = vmatmul.bf16.gmra.mxu0 %v632
        %v707 = vpop.f32.mrf.mxu0
        %v708 = vadd.f32 0.0, %v707
        %v709 = vpop.f32.mrf.mxu0
        %v710 = vadd.f32 0.0, %v709
        %711 = vmatmul.bf16.gmra.mxu0 %v635
        %v712 = vpop.f32.mrf.mxu0
        %v713 = vadd.f32 0.0, %v712
        %v714 = vpop.f32.mrf.mxu0
        %v715 = vadd.f32 0.0, %v714
        %716 = vmatmul.bf16.gmra.mxu0 %v638
        %v717 = vpop.f32.mrf.mxu0
        %v718 = vadd.f32 0.0, %v717
        %v719 = vpop.f32.mrf.mxu0
        %v720 = vadd.f32 0.0, %v719
        %721 = vmatmul.bf16.gmra.mxu0 %v641
        %v722 = vpop.f32.mrf.mxu0
        %v723 = vadd.f32 0.0, %v722
        %v724 = vpop.f32.mrf.mxu0
        %v725 = vadd.f32 0.0, %v724
        %726 = vmatmul.bf16.gmra.mxu0 %v644
        %v727 = vpop.f32.mrf.mxu0
        %v728 = vadd.f32 0.0, %v727
        %v729 = vpop.f32.mrf.mxu0
        %v730 = vadd.f32 0.0, %v729
        %731 = vmatmul.bf16.gmra.mxu0 %v647
        %v732 = vpop.f32.mrf.mxu0
        %v733 = vadd.f32 0.0, %v732
        %v734 = vpop.f32.mrf.mxu0
        %v735 = vadd.f32 0.0, %v734
        %736 = vmatmul.bf16.gmra.mxu0 %v650
        %v737 = vpop.f32.mrf.mxu0
        %v738 = vadd.f32 0.0, %v737
        %v739 = vpop.f32.mrf.mxu0
        %v740 = vadd.f32 0.0, %v739
        %741 = vmatmul.bf16.gmra.mxu0 %v653
        %v742 = vpop.f32.mrf.mxu0
        %v743 = vadd.f32 0.0, %v742
        %v744 = vpop.f32.mrf.mxu0
        %v745 = vadd.f32 0.0, %v744
        %746 = vmatmul.bf16.gmra.mxu0 %v656
        %v747 = vpop.f32.mrf.mxu0
        %v748 = vadd.f32 0.0, %v747
        %v749 = vpop.f32.mrf.mxu0
        %v750 = vadd.f32 0.0, %v749
        %751 = vmatmul.bf16.gmra.mxu0 %v659
        %v752 = vpop.f32.mrf.mxu0
        %v753 = vadd.f32 0.0, %v752
        %v754 = vpop.f32.mrf.mxu0
        %v755 = vadd.f32 0.0, %v754
        %756 = vmatmul.bf16.gmra.mxu0 %v662
        %v757 = vpop.f32.mrf.mxu0
        %v758 = vadd.f32 0.0, %v757
        %v759 = vpop.f32.mrf.mxu0
        %v760 = vadd.f32 0.0, %v759
        %761 = vmatmul.bf16.gmra.mxu0 %v665
        %v762 = vpop.f32.mrf.mxu0
        %v763 = vadd.f32 0.0, %v762
        %v764 = vpop.f32.mrf.mxu0
        %v765 = vadd.f32 0.0, %v764
        %766 = vmatmul.bf16.gmra.mxu0 %v668
        %v767 = vpop.f32.mrf.mxu0
        %v768 = vadd.f32 0.0, %v767
        %v769 = vpop.f32.mrf.mxu0
        %v770 = vadd.f32 0.0, %v769
        %771 = vmatmul.bf16.gmra.mxu0 %v671
        %v772 = vpop.f32.mrf.mxu0
        %v773 = vadd.f32 0.0, %v772
        %v774 = vpop.f32.mrf.mxu0
        %v775 = vadd.f32 0.0, %v774
        %776 = vmatmul.bf16.gmra.mxu0 %v674
        %v777 = vpop.f32.mrf.mxu0
        %v778 = vadd.f32 0.0, %v777
        %v779 = vpop.f32.mrf.mxu0
        %v780 = vadd.f32 0.0, %v779
        %781 = vdwg.mxu0
        %782 = vmatpush.bf16.msra.mxu0 0
        %783 = vmatpush.bf16.msra.mxu0 0
        %784 = vmatpush.bf16.msra.mxu0 0
        %785 = vmatpush.bf16.msra.mxu0 0
        %786 = vmatpush.bf16.msra.mxu0 %v681
        %787 = vmatpush.bf16.msra.mxu0 %v528
        %788 = vmatpush.bf16.msra.mxu0 %v526
        %789 = vmatpush.bf16.msra.mxu0 %v524
        %790 = vmatmul.bf16.gmra.mxu0 %v623
        %v791 = vpop.f32.mrf.mxu0
        %v792 = vadd.f32 0.0, %v791
        %v793 = vpop.f32.mrf.mxu0
        %v794 = vadd.f32 0.0, %v793
        %795 = vmatmul.bf16.gmra.mxu0 %v626
        %v796 = vpop.f32.mrf.mxu0
        %v797 = vadd.f32 0.0, %v796
        %v798 = vpop.f32.mrf.mxu0
        %v799 = vadd.f32 0.0, %v798
        %800 = vmatmul.bf16.gmra.mxu0 %v629
        %v801 = vpop.f32.mrf.mxu0
        %v802 = vadd.f32 0.0, %v801
        %v803 = vpop.f32.mrf.mxu0
        %v804 = vadd.f32 0.0, %v803
        %805 = vmatmul.bf16.gmra.mxu0 %v632
        %v806 = vpop.f32.mrf.mxu0
        %v807 = vadd.f32 0.0, %v806
        %v808 = vpop.f32.mrf.mxu0
        %v809 = vadd.f32 0.0, %v808
        %810 = vmatmul.bf16.gmra.mxu0 %v635
        %v811 = vpop.f32.mrf.mxu0
        %v812 = vadd.f32 0.0, %v811
        %v813 = vpop.f32.mrf.mxu0
        %v814 = vadd.f32 0.0, %v813
        %815 = vmatmul.bf16.gmra.mxu0 %v638
        %v816 = vpop.f32.mrf.mxu0
        %v817 = vadd.f32 0.0, %v816
        %v818 = vpop.f32.mrf.mxu0
        %v819 = vadd.f32 0.0, %v818
        %820 = vmatmul.bf16.gmra.mxu0 %v641
        %v821 = vpop.f32.mrf.mxu0
        %v822 = vadd.f32 0.0, %v821
        %v823 = vpop.f32.mrf.mxu0
        %v824 = vadd.f32 0.0, %v823
        %825 = vmatmul.bf16.gmra.mxu0 %v644
        %v826 = vpop.f32.mrf.mxu0
        %v827 = vadd.f32 0.0, %v826
        %v828 = vpop.f32.mrf.mxu0
        %v829 = vadd.f32 0.0, %v828
        %830 = vmatmul.bf16.gmra.mxu0 %v647
        %v831 = vpop.f32.mrf.mxu0
        %v832 = vadd.f32 0.0, %v831
        %v833 = vpop.f32.mrf.mxu0
        %v834 = vadd.f32 0.0, %v833
        %835 = vmatmul.bf16.gmra.mxu0 %v650
        %v836 = vpop.f32.mrf.mxu0
        %v837 = vadd.f32 0.0, %v836
        %v838 = vpop.f32.mrf.mxu0
        %v839 = vadd.f32 0.0, %v838
        %840 = vmatmul.bf16.gmra.mxu0 %v653
        %v841 = vpop.f32.mrf.mxu0
        %v842 = vadd.f32 0.0, %v841
        %v843 = vpop.f32.mrf.mxu0
        %v844 = vadd.f32 0.0, %v843
        %845 = vmatmul.bf16.gmra.mxu0 %v656
        %v846 = vpop.f32.mrf.mxu0
        %v847 = vadd.f32 0.0, %v846
        %v848 = vpop.f32.mrf.mxu0
        %v849 = vadd.f32 0.0, %v848
        %850 = vmatmul.bf16.gmra.mxu0 %v659
        %v851 = vpop.f32.mrf.mxu0
        %v852 = vadd.f32 0.0, %v851
        %v853 = vpop.f32.mrf.mxu0
        %v854 = vadd.f32 0.0, %v853
        %855 = vmatmul.bf16.gmra.mxu0 %v662
        %v856 = vpop.f32.mrf.mxu0
        %v857 = vadd.f32 0.0, %v856
        %v858 = vpop.f32.mrf.mxu0
        %v859 = vadd.f32 0.0, %v858
        %860 = vmatmul.bf16.gmra.mxu0 %v665
        %v861 = vpop.f32.mrf.mxu0
        %v862 = vadd.f32 0.0, %v861
        %v863 = vpop.f32.mrf.mxu0
        %v864 = vadd.f32 0.0, %v863
        %865 = vmatmul.bf16.gmra.mxu0 %v668
        %v866 = vpop.f32.mrf.mxu0
        %v867 = vadd.f32 0.0, %v866
        %v868 = vpop.f32.mrf.mxu0
        %v869 = vadd.f32 0.0, %v868
        %870 = vmatmul.bf16.gmra.mxu0 %v671
        %v871 = vpop.f32.mrf.mxu0
        %v872 = vadd.f32 0.0, %v871
        %v873 = vpop.f32.mrf.mxu0
        %v874 = vadd.f32 0.0, %v873
        %875 = vmatmul.bf16.gmra.mxu0 %v674
        %v876 = vpop.f32.mrf.mxu0
        %v877 = vadd.f32 0.0, %v876
        %v878 = vpop.f32.mrf.mxu0
        %v879 = vadd.f32 0.0, %v878
        %880 = vdwg.mxu0
        %v881 = vpack.c.bf16 %v695, %v693
        %v882 = vpack.c.bf16 %v794, %v792
        %v883 = vpack.c.bf16 %v700, %v698
        %v884 = vpack.c.bf16 %v799, %v797
        %v885 = vld [vmem:[#allocation2] sm:$0xf]
        %v886 = vld [vmem:[#allocation2 + $0x4] sm:$0xf]
        %v887 = vld [vmem:[#allocation2 + $0x8] sm:$0xf]
        %v888 = vld [vmem:[#allocation2 + $0xc] sm:$0xf]
        %v889 = vld [vmem:[#allocation2 + $0x10] sm:$0xf]
        %v890 = vld [vmem:[#allocation2 + $0x14] sm:$0xf]
        %v891 = vld [vmem:[#allocation2 + $0x18] sm:$0xf]
        %v892 = vld [vmem:[#allocation2 + $0x1c] sm:$0xf]
        %v893 = vld [vmem:[#allocation2 + $0x20] sm:$0xf]
        %v894 = vld [vmem:[#allocation2 + $0x24] sm:$0xf]
        %v895 = vld [vmem:[#allocation2 + $0x28] sm:$0xf]
        %v896 = vld [vmem:[#allocation2 + $0x2c] sm:$0xf]
        %v897 = vld [vmem:[#allocation2 + $0x30] sm:$0xf]
        %v898 = vld [vmem:[#allocation2 + $0x34] sm:$0xf]
        %v899 = vld [vmem:[#allocation2 + $0x38] sm:$0xf]
        %v900 = vld [vmem:[#allocation2 + $0x3c] sm:$0xf]
        %v901 = vld [vmem:[#allocation2 + $0x40] sm:$0xf]
        %v902 = vld [vmem:[#allocation2 + $0x44] sm:$0xf]
        %v903 = vld [vmem:[#allocation2 + $0x48] sm:$0xf]
        %v904 = vld [vmem:[#allocation2 + $0x4c] sm:$0xf]
        %v905 = vld [vmem:[#allocation2 + $0x50] sm:$0xf]
        %v906 = vld [vmem:[#allocation2 + $0x54] sm:$0xf]
        %v907 = vld [vmem:[#allocation2 + $0x58] sm:$0xf]
        %v908 = vld [vmem:[#allocation2 + $0x5c] sm:$0xf]
        %v909 = vld [vmem:[#allocation2 + $0x60] sm:$0xf]
        %v910 = vld [vmem:[#allocation2 + $0x64] sm:$0xf]
        %v911 = vld [vmem:[#allocation2 + $0x68] sm:$0xf]
        %v912 = vld [vmem:[#allocation2 + $0x6c] sm:$0xf]
        %v913 = vld [vmem:[#allocation2 + $0x70] sm:$0xf]
        %v914 = vld [vmem:[#allocation2 + $0x74] sm:$0xf]
        %v915 = vld [vmem:[#allocation2 + $0x78] sm:$0xf]
        %v916 = vld [vmem:[#allocation2 + $0x7c] sm:$0xf]
        %v917 = vpack.c.bf16 %v705, %v703
        %v918 = vpack.c.bf16 %v804, %v802
        %v919 = vpack.c.bf16 %v710, %v708
        %v920 = vpack.c.bf16 %v809, %v807
        %s921 = scalar_lea.vmem [#allocation2], 128
        %v922 = vld [vmem:[%s921] sm:$0xf]
        %v923 = vld [vmem:[%s921 + $0x4] sm:$0xf]
        %v924 = vld [vmem:[%s921 + $0x8] sm:$0xf]
        %v925 = vld [vmem:[%s921 + $0xc] sm:$0xf]
        %v926 = vld [vmem:[%s921 + $0x10] sm:$0xf]
        %v927 = vld [vmem:[%s921 + $0x14] sm:$0xf]
        %v928 = vld [vmem:[%s921 + $0x18] sm:$0xf]
        %v929 = vld [vmem:[%s921 + $0x1c] sm:$0xf]
        %v930 = vld [vmem:[%s921 + $0x20] sm:$0xf]
        %v931 = vld [vmem:[%s921 + $0x24] sm:$0xf]
        %v932 = vld [vmem:[%s921 + $0x28] sm:$0xf]
        %v933 = vld [vmem:[%s921 + $0x2c] sm:$0xf]
        %v934 = vld [vmem:[%s921 + $0x30] sm:$0xf]
        %v935 = vld [vmem:[%s921 + $0x34] sm:$0xf]
        %v936 = vld [vmem:[%s921 + $0x38] sm:$0xf]
        %v937 = vld [vmem:[%s921 + $0x3c] sm:$0xf]
        %v938 = vld [vmem:[%s921 + $0x40] sm:$0xf]
        %v939 = vld [vmem:[%s921 + $0x44] sm:$0xf]
        %v940 = vld [vmem:[%s921 + $0x48] sm:$0xf]
        %v941 = vld [vmem:[%s921 + $0x4c] sm:$0xf]
        %v942 = vld [vmem:[%s921 + $0x50] sm:$0xf]
        %v943 = vld [vmem:[%s921 + $0x54] sm:$0xf]
        %v944 = vld [vmem:[%s921 + $0x58] sm:$0xf]
        %v945 = vld [vmem:[%s921 + $0x5c] sm:$0xf]
        %v946 = vld [vmem:[%s921 + $0x60] sm:$0xf]
        %v947 = vld [vmem:[%s921 + $0x64] sm:$0xf]
        %v948 = vld [vmem:[%s921 + $0x68] sm:$0xf]
        %v949 = vld [vmem:[%s921 + $0x6c] sm:$0xf]
        %v950 = vld [vmem:[%s921 + $0x70] sm:$0xf]
        %v951 = vld [vmem:[%s921 + $0x74] sm:$0xf]
        %v952 = vld [vmem:[%s921 + $0x78] sm:$0xf]
        %v953 = vld [vmem:[%s921 + $0x7c] sm:$0xf]
        %v986 = vunpack.c.l.b16 %v922
        %v987 = vunpack.c.l.b16 %v923
        %v988 = vunpack.c.l.b16 %v924
        %v989 = vunpack.c.l.b16 %v925
        %v990 = vunpack.c.l.b16 %v926
        %v991 = vunpack.c.l.b16 %v927
        %v992 = vunpack.c.l.b16 %v928
        %v993 = vunpack.c.l.b16 %v929
        %v994 = vunpack.c.l.b16 %v930
        %v995 = vunpack.c.l.b16 %v931
        %v996 = vunpack.c.l.b16 %v932
        %v997 = vunpack.c.l.b16 %v933
        %v998 = vunpack.c.l.b16 %v934
        %v999 = vunpack.c.l.b16 %v935
        %v1000 = vunpack.c.l.b16 %v936
        %v1001 = vunpack.c.l.b16 %v937
        %v1002 = vunpack.c.l.b16 %v938
        %v1003 = vunpack.c.l.b16 %v939
        %v1004 = vunpack.c.l.b16 %v940
        %v1005 = vunpack.c.l.b16 %v941
        %v1006 = vunpack.c.l.b16 %v942
        %v1007 = vunpack.c.l.b16 %v943
        %v1008 = vunpack.c.l.b16 %v944
        %v1009 = vunpack.c.l.b16 %v945
        %v1010 = vunpack.c.l.b16 %v946
        %v1011 = vunpack.c.l.b16 %v947
        %v1012 = vunpack.c.l.b16 %v948
        %v1013 = vunpack.c.l.b16 %v949
        %v1014 = vunpack.c.l.b16 %v950
        %v1015 = vunpack.c.l.b16 %v951
        %v1016 = vunpack.c.l.b16 %v952
        %v1017 = vunpack.c.l.b16 %v953
        %v1018 = vpack.c.b16 %v987, %v986
        %v1019 = vpack.c.b16 %v989, %v988
        %v1020 = vpack.c.b16 %v991, %v990
        %v1021 = vpack.c.b16 %v993, %v992
        %v1022 = vpack.c.b16 %v995, %v994
        %v1023 = vpack.c.b16 %v997, %v996
        %v1024 = vpack.c.b16 %v999, %v998
        %v1025 = vpack.c.b16 %v1001, %v1000
        %v1026 = vpack.c.b16 %v1003, %v1002
        %v1027 = vpack.c.b16 %v1005, %v1004
        %v1028 = vpack.c.b16 %v1007, %v1006
        %v1029 = vpack.c.b16 %v1009, %v1008
        %v1030 = vpack.c.b16 %v1011, %v1010
        %v1031 = vpack.c.b16 %v1013, %v1012
        %v1032 = vpack.c.b16 %v1015, %v1014
        %v1033 = vpack.c.b16 %v1017, %v1016
        %1050 = vmatpush.bf16.msra.mxu0 %v1025
        %1051 = vmatpush.bf16.msra.mxu0 %v1024
        %1052 = vmatpush.bf16.msra.mxu0 %v1023
        %1053 = vmatpush.bf16.msra.mxu0 %v1022
        %1054 = vmatpush.bf16.msra.mxu0 %v1021
        %1055 = vmatpush.bf16.msra.mxu0 %v1020
        %1056 = vmatpush.bf16.msra.mxu0 %v1019
        %1057 = vmatpush.bf16.msra.mxu0 %v1018
        %1058 = vmatmul.bf16.gmra.mxu0 %v917
        %v1059 = vpop.f32.mrf.mxu0
        %v1060 = vadd.f32 0.0, %v1059
        %v1061 = vpop.f32.mrf.mxu0
        %v1062 = vadd.f32 0.0, %v1061
        %1063 = vmatmul.bf16.gmra.mxu0 %v919
        %v1064 = vpop.f32.mrf.mxu0
        %v1065 = vadd.f32 0.0, %v1064
        %v1066 = vpop.f32.mrf.mxu0
        %v1067 = vadd.f32 0.0, %v1066
        %1068 = vdwg.mxu0
        %1069 = vmatpush.bf16.msra.mxu0 %v1033
        %1070 = vmatpush.bf16.msra.mxu0 %v1032
        %1071 = vmatpush.bf16.msra.mxu0 %v1031
        %1072 = vmatpush.bf16.msra.mxu0 %v1030
        %1073 = vmatpush.bf16.msra.mxu0 %v1029
        %1074 = vmatpush.bf16.msra.mxu0 %v1028
        %1075 = vmatpush.bf16.msra.mxu0 %v1027
        %1076 = vmatpush.bf16.msra.mxu0 %v1026
        %1077 = vmatmul.bf16.gmra.mxu0 %v918
        %v1078 = vpop.f32.mrf.mxu0
        %v1079 = vadd.f32 %v1060, %v1078
        %v1080 = vpop.f32.mrf.mxu0
        %v1081 = vadd.f32 %v1062, %v1080
        %1082 = vmatmul.bf16.gmra.mxu0 %v920
        %v1083 = vpop.f32.mrf.mxu0
        %v1084 = vadd.f32 %v1065, %v1083
        %v1085 = vpop.f32.mrf.mxu0
        %v1086 = vadd.f32 %v1067, %v1085
        %1087 = vdwg.mxu0
        %v1120 = vunpack.c.l.b16 %v885
        %v1121 = vunpack.c.l.b16 %v886
        %v1122 = vunpack.c.l.b16 %v887
        %v1123 = vunpack.c.l.b16 %v888
        %v1124 = vunpack.c.l.b16 %v889
        %v1125 = vunpack.c.l.b16 %v890
        %v1126 = vunpack.c.l.b16 %v891
        %v1127 = vunpack.c.l.b16 %v892
        %v1128 = vunpack.c.l.b16 %v893
        %v1129 = vunpack.c.l.b16 %v894
        %v1130 = vunpack.c.l.b16 %v895
        %v1131 = vunpack.c.l.b16 %v896
        %v1132 = vunpack.c.l.b16 %v897
        %v1133 = vunpack.c.l.b16 %v898
        %v1134 = vunpack.c.l.b16 %v899
        %v1135 = vunpack.c.l.b16 %v900
        %v1136 = vunpack.c.l.b16 %v901
        %v1137 = vunpack.c.l.b16 %v902
        %v1138 = vunpack.c.l.b16 %v903
        %v1139 = vunpack.c.l.b16 %v904
        %v1140 = vunpack.c.l.b16 %v905
        %v1141 = vunpack.c.l.b16 %v906
        %v1142 = vunpack.c.l.b16 %v907
        %v1143 = vunpack.c.l.b16 %v908
        %v1144 = vunpack.c.l.b16 %v909
        %v1145 = vunpack.c.l.b16 %v910
        %v1146 = vunpack.c.l.b16 %v911
        %v1147 = vunpack.c.l.b16 %v912
        %v1148 = vunpack.c.l.b16 %v913
        %v1149 = vunpack.c.l.b16 %v914
        %v1150 = vunpack.c.l.b16 %v915
        %v1151 = vunpack.c.l.b16 %v916
        %v1152 = vpack.c.b16 %v1121, %v1120
        %v1153 = vpack.c.b16 %v1123, %v1122
        %v1154 = vpack.c.b16 %v1125, %v1124
        %v1155 = vpack.c.b16 %v1127, %v1126
        %v1156 = vpack.c.b16 %v1129, %v1128
        %v1157 = vpack.c.b16 %v1131, %v1130
        %v1158 = vpack.c.b16 %v1133, %v1132
        %v1159 = vpack.c.b16 %v1135, %v1134
        %v1160 = vpack.c.b16 %v1137, %v1136
        %v1161 = vpack.c.b16 %v1139, %v1138
        %v1162 = vpack.c.b16 %v1141, %v1140
        %v1163 = vpack.c.b16 %v1143, %v1142
        %v1164 = vpack.c.b16 %v1145, %v1144
        %v1165 = vpack.c.b16 %v1147, %v1146
        %v1166 = vpack.c.b16 %v1149, %v1148
        %v1167 = vpack.c.b16 %v1151, %v1150
        %1184 = vmatpush.bf16.msra.mxu0 %v1159
        %1185 = vmatpush.bf16.msra.mxu0 %v1158
        %1186 = vmatpush.bf16.msra.mxu0 %v1157
        %1187 = vmatpush.bf16.msra.mxu0 %v1156
        %1188 = vmatpush.bf16.msra.mxu0 %v1155
        %1189 = vmatpush.bf16.msra.mxu0 %v1154
        %1190 = vmatpush.bf16.msra.mxu0 %v1153
        %1191 = vmatpush.bf16.msra.mxu0 %v1152
        %1192 = vmatmul.bf16.gmra.mxu0 %v881
        %v1193 = vpop.f32.mrf.mxu0
        %v1194 = vadd.f32 %v1079, %v1193
        %v1195 = vpop.f32.mrf.mxu0
        %v1196 = vadd.f32 %v1081, %v1195
        %1197 = vmatmul.bf16.gmra.mxu0 %v883
        %v1198 = vpop.f32.mrf.mxu0
        %v1199 = vadd.f32 %v1084, %v1198
        %v1200 = vpop.f32.mrf.mxu0
        %v1201 = vadd.f32 %v1086, %v1200
        %1202 = vdwg.mxu0
        %1203 = vmatpush.bf16.msra.mxu0 %v1167
        %1204 = vmatpush.bf16.msra.mxu0 %v1166
        %1205 = vmatpush.bf16.msra.mxu0 %v1165
        %1206 = vmatpush.bf16.msra.mxu0 %v1164
        %1207 = vmatpush.bf16.msra.mxu0 %v1163
        %1208 = vmatpush.bf16.msra.mxu0 %v1162
        %1209 = vmatpush.bf16.msra.mxu0 %v1161
        %1210 = vmatpush.bf16.msra.mxu0 %v1160
        %1211 = vmatmul.bf16.gmra.mxu0 %v882
        %v1212 = vpop.f32.mrf.mxu0
        %v1213 = vadd.f32 %v1194, %v1212
        %v1214 = vpop.f32.mrf.mxu0
        %v1215 = vadd.f32 %v1196, %v1214
        %1216 = vmatmul.bf16.gmra.mxu0 %v884
        %v1217 = vpop.f32.mrf.mxu0
        %v1218 = vadd.f32 %v1199, %v1217
        %v1219 = vpop.f32.mrf.mxu0
        %v1220 = vadd.f32 %v1201, %v1219
        %1221 = vdwg.mxu0
        %v1222 = vpack.c.bf16 %v715, %v713
        %v1223 = vpack.c.bf16 %v814, %v812
        %v1224 = vpack.c.bf16 %v720, %v718
        %v1225 = vpack.c.bf16 %v819, %v817
        %s1226 = scalar_lea.vmem [#allocation2], 256
        %v1227 = vld [vmem:[%s1226] sm:$0xf]
        %v1228 = vld [vmem:[%s1226 + $0x4] sm:$0xf]
        %v1229 = vld [vmem:[%s1226 + $0x8] sm:$0xf]
        %v1230 = vld [vmem:[%s1226 + $0xc] sm:$0xf]
        %v1231 = vld [vmem:[%s1226 + $0x10] sm:$0xf]
        %v1232 = vld [vmem:[%s1226 + $0x14] sm:$0xf]
        %v1233 = vld [vmem:[%s1226 + $0x18] sm:$0xf]
        %v1234 = vld [vmem:[%s1226 + $0x1c] sm:$0xf]
        %v1235 = vld [vmem:[%s1226 + $0x20] sm:$0xf]
        %v1236 = vld [vmem:[%s1226 + $0x24] sm:$0xf]
        %v1237 = vld [vmem:[%s1226 + $0x28] sm:$0xf]
        %v1238 = vld [vmem:[%s1226 + $0x2c] sm:$0xf]
        %v1239 = vld [vmem:[%s1226 + $0x30] sm:$0xf]
        %v1240 = vld [vmem:[%s1226 + $0x34] sm:$0xf]
        %v1241 = vld [vmem:[%s1226 + $0x38] sm:$0xf]
        %v1242 = vld [vmem:[%s1226 + $0x3c] sm:$0xf]
        %v1243 = vld [vmem:[%s1226 + $0x40] sm:$0xf]
        %v1244 = vld [vmem:[%s1226 + $0x44] sm:$0xf]
        %v1245 = vld [vmem:[%s1226 + $0x48] sm:$0xf]
        %v1246 = vld [vmem:[%s1226 + $0x4c] sm:$0xf]
        %v1247 = vld [vmem:[%s1226 + $0x50] sm:$0xf]
        %v1248 = vld [vmem:[%s1226 + $0x54] sm:$0xf]
        %v1249 = vld [vmem:[%s1226 + $0x58] sm:$0xf]
        %v1250 = vld [vmem:[%s1226 + $0x5c] sm:$0xf]
        %v1251 = vld [vmem:[%s1226 + $0x60] sm:$0xf]
        %v1252 = vld [vmem:[%s1226 + $0x64] sm:$0xf]
        %v1253 = vld [vmem:[%s1226 + $0x68] sm:$0xf]
        %v1254 = vld [vmem:[%s1226 + $0x6c] sm:$0xf]
        %v1255 = vld [vmem:[%s1226 + $0x70] sm:$0xf]
        %v1256 = vld [vmem:[%s1226 + $0x74] sm:$0xf]
        %v1257 = vld [vmem:[%s1226 + $0x78] sm:$0xf]
        %v1258 = vld [vmem:[%s1226 + $0x7c] sm:$0xf]
        %v1291 = vunpack.c.l.b16 %v1227
        %v1292 = vunpack.c.l.b16 %v1228
        %v1293 = vunpack.c.l.b16 %v1229
        %v1294 = vunpack.c.l.b16 %v1230
        %v1295 = vunpack.c.l.b16 %v1231
        %v1296 = vunpack.c.l.b16 %v1232
        %v1297 = vunpack.c.l.b16 %v1233
        %v1298 = vunpack.c.l.b16 %v1234
        %v1299 = vunpack.c.l.b16 %v1235
        %v1300 = vunpack.c.l.b16 %v1236
        %v1301 = vunpack.c.l.b16 %v1237
        %v1302 = vunpack.c.l.b16 %v1238
        %v1303 = vunpack.c.l.b16 %v1239
        %v1304 = vunpack.c.l.b16 %v1240
        %v1305 = vunpack.c.l.b16 %v1241
        %v1306 = vunpack.c.l.b16 %v1242
        %v1307 = vunpack.c.l.b16 %v1243
        %v1308 = vunpack.c.l.b16 %v1244
        %v1309 = vunpack.c.l.b16 %v1245
        %v1310 = vunpack.c.l.b16 %v1246
        %v1311 = vunpack.c.l.b16 %v1247
        %v1312 = vunpack.c.l.b16 %v1248
        %v1313 = vunpack.c.l.b16 %v1249
        %v1314 = vunpack.c.l.b16 %v1250
        %v1315 = vunpack.c.l.b16 %v1251
        %v1316 = vunpack.c.l.b16 %v1252
        %v1317 = vunpack.c.l.b16 %v1253
        %v1318 = vunpack.c.l.b16 %v1254
        %v1319 = vunpack.c.l.b16 %v1255
        %v1320 = vunpack.c.l.b16 %v1256
        %v1321 = vunpack.c.l.b16 %v1257
        %v1322 = vunpack.c.l.b16 %v1258
        %v1323 = vpack.c.b16 %v1292, %v1291
        %v1324 = vpack.c.b16 %v1294, %v1293
        %v1325 = vpack.c.b16 %v1296, %v1295
        %v1326 = vpack.c.b16 %v1298, %v1297
        %v1327 = vpack.c.b16 %v1300, %v1299
        %v1328 = vpack.c.b16 %v1302, %v1301
        %v1329 = vpack.c.b16 %v1304, %v1303
        %v1330 = vpack.c.b16 %v1306, %v1305
        %v1331 = vpack.c.b16 %v1308, %v1307
        %v1332 = vpack.c.b16 %v1310, %v1309
        %v1333 = vpack.c.b16 %v1312, %v1311
        %v1334 = vpack.c.b16 %v1314, %v1313
        %v1335 = vpack.c.b16 %v1316, %v1315
        %v1336 = vpack.c.b16 %v1318, %v1317
        %v1337 = vpack.c.b16 %v1320, %v1319
        %v1338 = vpack.c.b16 %v1322, %v1321
        %1355 = vmatpush.bf16.msra.mxu0 %v1330
        %1356 = vmatpush.bf16.msra.mxu0 %v1329
        %1357 = vmatpush.bf16.msra.mxu0 %v1328
        %1358 = vmatpush.bf16.msra.mxu0 %v1327
        %1359 = vmatpush.bf16.msra.mxu0 %v1326
        %1360 = vmatpush.bf16.msra.mxu0 %v1325
        %1361 = vmatpush.bf16.msra.mxu0 %v1324
        %1362 = vmatpush.bf16.msra.mxu0 %v1323
        %1363 = vmatmul.bf16.gmra.mxu0 %v1222
        %v1364 = vpop.f32.mrf.mxu0
        %v1365 = vadd.f32 0.0, %v1364
        %v1366 = vpop.f32.mrf.mxu0
        %v1367 = vadd.f32 0.0, %v1366
        %1368 = vmatmul.bf16.gmra.mxu0 %v1224
        %v1369 = vpop.f32.mrf.mxu0
        %v1370 = vadd.f32 0.0, %v1369
        %v1371 = vpop.f32.mrf.mxu0
        %v1372 = vadd.f32 0.0, %v1371
        %1373 = vdwg.mxu0
        %1374 = vmatpush.bf16.msra.mxu0 %v1338
        %1375 = vmatpush.bf16.msra.mxu0 %v1337
        %1376 = vmatpush.bf16.msra.mxu0 %v1336
        %1377 = vmatpush.bf16.msra.mxu0 %v1335
        %1378 = vmatpush.bf16.msra.mxu0 %v1334
        %1379 = vmatpush.bf16.msra.mxu0 %v1333
        %1380 = vmatpush.bf16.msra.mxu0 %v1332
        %1381 = vmatpush.bf16.msra.mxu0 %v1331
        %1382 = vmatmul.bf16.gmra.mxu0 %v1223
        %v1383 = vpop.f32.mrf.mxu0
        %v1384 = vadd.f32 %v1365, %v1383
        %v1385 = vpop.f32.mrf.mxu0
        %v1386 = vadd.f32 %v1367, %v1385
        %1387 = vmatmul.bf16.gmra.mxu0 %v1225
        %v1388 = vpop.f32.mrf.mxu0
        %v1389 = vadd.f32 %v1370, %v1388
        %v1390 = vpop.f32.mrf.mxu0
        %v1391 = vadd.f32 %v1372, %v1390
        %1392 = vdwg.mxu0
        %v1393 = vadd.f32 %v1213, %v1384
        %v1394 = vadd.f32 %v1215, %v1386
        %v1395 = vadd.f32 %v1218, %v1389
        %v1396 = vadd.f32 %v1220, %v1391
        %v1397 = vpack.c.bf16 %v725, %v723
        %v1398 = vpack.c.bf16 %v824, %v822
        %v1399 = vpack.c.bf16 %v730, %v728
        %v1400 = vpack.c.bf16 %v829, %v827
        %s1401 = scalar_lea.vmem [#allocation2], 384
        %v1402 = vld [vmem:[%s1401] sm:$0xf]
        %v1403 = vld [vmem:[%s1401 + $0x4] sm:$0xf]
        %v1404 = vld [vmem:[%s1401 + $0x8] sm:$0xf]
        %v1405 = vld [vmem:[%s1401 + $0xc] sm:$0xf]
        %v1406 = vld [vmem:[%s1401 + $0x10] sm:$0xf]
        %v1407 = vld [vmem:[%s1401 + $0x14] sm:$0xf]
        %v1408 = vld [vmem:[%s1401 + $0x18] sm:$0xf]
        %v1409 = vld [vmem:[%s1401 + $0x1c] sm:$0xf]
        %v1410 = vld [vmem:[%s1401 + $0x20] sm:$0xf]
        %v1411 = vld [vmem:[%s1401 + $0x24] sm:$0xf]
        %v1412 = vld [vmem:[%s1401 + $0x28] sm:$0xf]
        %v1413 = vld [vmem:[%s1401 + $0x2c] sm:$0xf]
        %v1414 = vld [vmem:[%s1401 + $0x30] sm:$0xf]
        %v1415 = vld [vmem:[%s1401 + $0x34] sm:$0xf]
        %v1416 = vld [vmem:[%s1401 + $0x38] sm:$0xf]
        %v1417 = vld [vmem:[%s1401 + $0x3c] sm:$0xf]
        %v1418 = vld [vmem:[%s1401 + $0x40] sm:$0xf]
        %v1419 = vld [vmem:[%s1401 + $0x44] sm:$0xf]
        %v1420 = vld [vmem:[%s1401 + $0x48] sm:$0xf]
        %v1421 = vld [vmem:[%s1401 + $0x4c] sm:$0xf]
        %v1422 = vld [vmem:[%s1401 + $0x50] sm:$0xf]
        %v1423 = vld [vmem:[%s1401 + $0x54] sm:$0xf]
        %v1424 = vld [vmem:[%s1401 + $0x58] sm:$0xf]
        %v1425 = vld [vmem:[%s1401 + $0x5c] sm:$0xf]
        %v1426 = vld [vmem:[%s1401 + $0x60] sm:$0xf]
        %v1427 = vld [vmem:[%s1401 + $0x64] sm:$0xf]
        %v1428 = vld [vmem:[%s1401 + $0x68] sm:$0xf]
        %v1429 = vld [vmem:[%s1401 + $0x6c] sm:$0xf]
        %v1430 = vld [vmem:[%s1401 + $0x70] sm:$0xf]
        %v1431 = vld [vmem:[%s1401 + $0x74] sm:$0xf]
        %v1432 = vld [vmem:[%s1401 + $0x78] sm:$0xf]
        %v1433 = vld [vmem:[%s1401 + $0x7c] sm:$0xf]
        %v1466 = vunpack.c.l.b16 %v1402
        %v1467 = vunpack.c.l.b16 %v1403
        %v1468 = vunpack.c.l.b16 %v1404
        %v1469 = vunpack.c.l.b16 %v1405
        %v1470 = vunpack.c.l.b16 %v1406
        %v1471 = vunpack.c.l.b16 %v1407
        %v1472 = vunpack.c.l.b16 %v1408
        %v1473 = vunpack.c.l.b16 %v1409
        %v1474 = vunpack.c.l.b16 %v1410
        %v1475 = vunpack.c.l.b16 %v1411
        %v1476 = vunpack.c.l.b16 %v1412
        %v1477 = vunpack.c.l.b16 %v1413
        %v1478 = vunpack.c.l.b16 %v1414
        %v1479 = vunpack.c.l.b16 %v1415
        %v1480 = vunpack.c.l.b16 %v1416
        %v1481 = vunpack.c.l.b16 %v1417
        %v1482 = vunpack.c.l.b16 %v1418
        %v1483 = vunpack.c.l.b16 %v1419
        %v1484 = vunpack.c.l.b16 %v1420
        %v1485 = vunpack.c.l.b16 %v1421
        %v1486 = vunpack.c.l.b16 %v1422
        %v1487 = vunpack.c.l.b16 %v1423
        %v1488 = vunpack.c.l.b16 %v1424
        %v1489 = vunpack.c.l.b16 %v1425
        %v1490 = vunpack.c.l.b16 %v1426
        %v1491 = vunpack.c.l.b16 %v1427
        %v1492 = vunpack.c.l.b16 %v1428
        %v1493 = vunpack.c.l.b16 %v1429
        %v1494 = vunpack.c.l.b16 %v1430
        %v1495 = vunpack.c.l.b16 %v1431
        %v1496 = vunpack.c.l.b16 %v1432
        %v1497 = vunpack.c.l.b16 %v1433
        %v1498 = vpack.c.b16 %v1467, %v1466
        %v1499 = vpack.c.b16 %v1469, %v1468
        %v1500 = vpack.c.b16 %v1471, %v1470
        %v1501 = vpack.c.b16 %v1473, %v1472
        %v1502 = vpack.c.b16 %v1475, %v1474
        %v1503 = vpack.c.b16 %v1477, %v1476
        %v1504 = vpack.c.b16 %v1479, %v1478
        %v1505 = vpack.c.b16 %v1481, %v1480
        %v1506 = vpack.c.b16 %v1483, %v1482
        %v1507 = vpack.c.b16 %v1485, %v1484
        %v1508 = vpack.c.b16 %v1487, %v1486
        %v1509 = vpack.c.b16 %v1489, %v1488
        %v1510 = vpack.c.b16 %v1491, %v1490
        %v1511 = vpack.c.b16 %v1493, %v1492
        %v1512 = vpack.c.b16 %v1495, %v1494
        %v1513 = vpack.c.b16 %v1497, %v1496
        %1530 = vmatpush.bf16.msra.mxu0 %v1505
        %1531 = vmatpush.bf16.msra.mxu0 %v1504
        %1532 = vmatpush.bf16.msra.mxu0 %v1503
        %1533 = vmatpush.bf16.msra.mxu0 %v1502
        %1534 = vmatpush.bf16.msra.mxu0 %v1501
        %1535 = vmatpush.bf16.msra.mxu0 %v1500
        %1536 = vmatpush.bf16.msra.mxu0 %v1499
        %1537 = vmatpush.bf16.msra.mxu0 %v1498
        %1538 = vmatmul.bf16.gmra.mxu0 %v1397
        %v1539 = vpop.f32.mrf.mxu0
        %v1540 = vadd.f32 0.0, %v1539
        %v1541 = vpop.f32.mrf.mxu0
        %v1542 = vadd.f32 0.0, %v1541
        %1543 = vmatmul.bf16.gmra.mxu0 %v1399
        %v1544 = vpop.f32.mrf.mxu0
        %v1545 = vadd.f32 0.0, %v1544
        %v1546 = vpop.f32.mrf.mxu0
        %v1547 = vadd.f32 0.0, %v1546
        %1548 = vdwg.mxu0
        %1549 = vmatpush.bf16.msra.mxu0 %v1513
        %1550 = vmatpush.bf16.msra.mxu0 %v1512
        %1551 = vmatpush.bf16.msra.mxu0 %v1511
        %1552 = vmatpush.bf16.msra.mxu0 %v1510
        %1553 = vmatpush.bf16.msra.mxu0 %v1509
        %1554 = vmatpush.bf16.msra.mxu0 %v1508
        %1555 = vmatpush.bf16.msra.mxu0 %v1507
        %1556 = vmatpush.bf16.msra.mxu0 %v1506
        %1557 = vmatmul.bf16.gmra.mxu0 %v1398
        %v1558 = vpop.f32.mrf.mxu0
        %v1559 = vadd.f32 %v1540, %v1558
        %v1560 = vpop.f32.mrf.mxu0
        %v1561 = vadd.f32 %v1542, %v1560
        %1562 = vmatmul.bf16.gmra.mxu0 %v1400
        %v1563 = vpop.f32.mrf.mxu0
        %v1564 = vadd.f32 %v1545, %v1563
        %v1565 = vpop.f32.mrf.mxu0
        %v1566 = vadd.f32 %v1547, %v1565
        %1567 = vdwg.mxu0
        %v1568 = vadd.f32 %v1393, %v1559
        %v1569 = vadd.f32 %v1394, %v1561
        %v1570 = vadd.f32 %v1395, %v1564
        %v1571 = vadd.f32 %v1396, %v1566
        %v1572 = vpack.c.bf16 %v735, %v733
        %v1573 = vpack.c.bf16 %v834, %v832
        %v1574 = vpack.c.bf16 %v740, %v738
        %v1575 = vpack.c.bf16 %v839, %v837
        %s1576 = scalar_lea.vmem [#allocation2], 512
        %v1577 = vld [vmem:[%s1576] sm:$0xf]
        %v1578 = vld [vmem:[%s1576 + $0x4] sm:$0xf]
        %v1579 = vld [vmem:[%s1576 + $0x8] sm:$0xf]
        %v1580 = vld [vmem:[%s1576 + $0xc] sm:$0xf]
        %v1581 = vld [vmem:[%s1576 + $0x10] sm:$0xf]
        %v1582 = vld [vmem:[%s1576 + $0x14] sm:$0xf]
        %v1583 = vld [vmem:[%s1576 + $0x18] sm:$0xf]
        %v1584 = vld [vmem:[%s1576 + $0x1c] sm:$0xf]
        %v1585 = vld [vmem:[%s1576 + $0x20] sm:$0xf]
        %v1586 = vld [vmem:[%s1576 + $0x24] sm:$0xf]
        %v1587 = vld [vmem:[%s1576 + $0x28] sm:$0xf]
        %v1588 = vld [vmem:[%s1576 + $0x2c] sm:$0xf]
        %v1589 = vld [vmem:[%s1576 + $0x30] sm:$0xf]
        %v1590 = vld [vmem:[%s1576 + $0x34] sm:$0xf]
        %v1591 = vld [vmem:[%s1576 + $0x38] sm:$0xf]
        %v1592 = vld [vmem:[%s1576 + $0x3c] sm:$0xf]
        %v1593 = vld [vmem:[%s1576 + $0x40] sm:$0xf]
        %v1594 = vld [vmem:[%s1576 + $0x44] sm:$0xf]
        %v1595 = vld [vmem:[%s1576 + $0x48] sm:$0xf]
        %v1596 = vld [vmem:[%s1576 + $0x4c] sm:$0xf]
        %v1597 = vld [vmem:[%s1576 + $0x50] sm:$0xf]
        %v1598 = vld [vmem:[%s1576 + $0x54] sm:$0xf]
        %v1599 = vld [vmem:[%s1576 + $0x58] sm:$0xf]
        %v1600 = vld [vmem:[%s1576 + $0x5c] sm:$0xf]
        %v1601 = vld [vmem:[%s1576 + $0x60] sm:$0xf]
        %v1602 = vld [vmem:[%s1576 + $0x64] sm:$0xf]
        %v1603 = vld [vmem:[%s1576 + $0x68] sm:$0xf]
        %v1604 = vld [vmem:[%s1576 + $0x6c] sm:$0xf]
        %v1605 = vld [vmem:[%s1576 + $0x70] sm:$0xf]
        %v1606 = vld [vmem:[%s1576 + $0x74] sm:$0xf]
        %v1607 = vld [vmem:[%s1576 + $0x78] sm:$0xf]
        %v1608 = vld [vmem:[%s1576 + $0x7c] sm:$0xf]
        %v1641 = vunpack.c.l.b16 %v1577
        %v1642 = vunpack.c.l.b16 %v1578
        %v1643 = vunpack.c.l.b16 %v1579
        %v1644 = vunpack.c.l.b16 %v1580
        %v1645 = vunpack.c.l.b16 %v1581
        %v1646 = vunpack.c.l.b16 %v1582
        %v1647 = vunpack.c.l.b16 %v1583
        %v1648 = vunpack.c.l.b16 %v1584
        %v1649 = vunpack.c.l.b16 %v1585
        %v1650 = vunpack.c.l.b16 %v1586
        %v1651 = vunpack.c.l.b16 %v1587
        %v1652 = vunpack.c.l.b16 %v1588
        %v1653 = vunpack.c.l.b16 %v1589
        %v1654 = vunpack.c.l.b16 %v1590
        %v1655 = vunpack.c.l.b16 %v1591
        %v1656 = vunpack.c.l.b16 %v1592
        %v1657 = vunpack.c.l.b16 %v1593
        %v1658 = vunpack.c.l.b16 %v1594
        %v1659 = vunpack.c.l.b16 %v1595
        %v1660 = vunpack.c.l.b16 %v1596
        %v1661 = vunpack.c.l.b16 %v1597
        %v1662 = vunpack.c.l.b16 %v1598
        %v1663 = vunpack.c.l.b16 %v1599
        %v1664 = vunpack.c.l.b16 %v1600
        %v1665 = vunpack.c.l.b16 %v1601
        %v1666 = vunpack.c.l.b16 %v1602
        %v1667 = vunpack.c.l.b16 %v1603
        %v1668 = vunpack.c.l.b16 %v1604
        %v1669 = vunpack.c.l.b16 %v1605
        %v1670 = vunpack.c.l.b16 %v1606
        %v1671 = vunpack.c.l.b16 %v1607
        %v1672 = vunpack.c.l.b16 %v1608
        %v1673 = vpack.c.b16 %v1642, %v1641
        %v1674 = vpack.c.b16 %v1644, %v1643
        %v1675 = vpack.c.b16 %v1646, %v1645
        %v1676 = vpack.c.b16 %v1648, %v1647
        %v1677 = vpack.c.b16 %v1650, %v1649
        %v1678 = vpack.c.b16 %v1652, %v1651
        %v1679 = vpack.c.b16 %v1654, %v1653
        %v1680 = vpack.c.b16 %v1656, %v1655
        %v1681 = vpack.c.b16 %v1658, %v1657
        %v1682 = vpack.c.b16 %v1660, %v1659
        %v1683 = vpack.c.b16 %v1662, %v1661
        %v1684 = vpack.c.b16 %v1664, %v1663
        %v1685 = vpack.c.b16 %v1666, %v1665
        %v1686 = vpack.c.b16 %v1668, %v1667
        %v1687 = vpack.c.b16 %v1670, %v1669
        %v1688 = vpack.c.b16 %v1672, %v1671
        %1705 = vmatpush.bf16.msra.mxu0 %v1680
        %1706 = vmatpush.bf16.msra.mxu0 %v1679
        %1707 = vmatpush.bf16.msra.mxu0 %v1678
        %1708 = vmatpush.bf16.msra.mxu0 %v1677
        %1709 = vmatpush.bf16.msra.mxu0 %v1676
        %1710 = vmatpush.bf16.msra.mxu0 %v1675
        %1711 = vmatpush.bf16.msra.mxu0 %v1674
        %1712 = vmatpush.bf16.msra.mxu0 %v1673
        %1713 = vmatmul.bf16.gmra.mxu0 %v1572
        %v1714 = vpop.f32.mrf.mxu0
        %v1715 = vadd.f32 0.0, %v1714
        %v1716 = vpop.f32.mrf.mxu0
        %v1717 = vadd.f32 0.0, %v1716
        %1718 = vmatmul.bf16.gmra.mxu0 %v1574
        %v1719 = vpop.f32.mrf.mxu0
        %v1720 = vadd.f32 0.0, %v1719
        %v1721 = vpop.f32.mrf.mxu0
        %v1722 = vadd.f32 0.0, %v1721
        %1723 = vdwg.mxu0
        %1724 = vmatpush.bf16.msra.mxu0 %v1688
        %1725 = vmatpush.bf16.msra.mxu0 %v1687
        %1726 = vmatpush.bf16.msra.mxu0 %v1686
        %1727 = vmatpush.bf16.msra.mxu0 %v1685
        %1728 = vmatpush.bf16.msra.mxu0 %v1684
        %1729 = vmatpush.bf16.msra.mxu0 %v1683
        %1730 = vmatpush.bf16.msra.mxu0 %v1682
        %1731 = vmatpush.bf16.msra.mxu0 %v1681
        %1732 = vmatmul.bf16.gmra.mxu0 %v1573
        %v1733 = vpop.f32.mrf.mxu0
        %v1734 = vadd.f32 %v1715, %v1733
        %v1735 = vpop.f32.mrf.mxu0
        %v1736 = vadd.f32 %v1717, %v1735
        %1737 = vmatmul.bf16.gmra.mxu0 %v1575
        %v1738 = vpop.f32.mrf.mxu0
        %v1739 = vadd.f32 %v1720, %v1738
        %v1740 = vpop.f32.mrf.mxu0
        %v1741 = vadd.f32 %v1722, %v1740
        %1742 = vdwg.mxu0
        %v1743 = vadd.f32 %v1568, %v1734
        %v1744 = vadd.f32 %v1569, %v1736
        %v1745 = vadd.f32 %v1570, %v1739
        %v1746 = vadd.f32 %v1571, %v1741
        %v1747 = vpack.c.bf16 %v745, %v743
        %v1748 = vpack.c.bf16 %v844, %v842
        %v1749 = vpack.c.bf16 %v750, %v748
        %v1750 = vpack.c.bf16 %v849, %v847
        %s1751 = scalar_lea.vmem [#allocation2], 640
        %v1752 = vld [vmem:[%s1751] sm:$0xf]
        %v1753 = vld [vmem:[%s1751 + $0x4] sm:$0xf]
        %v1754 = vld [vmem:[%s1751 + $0x8] sm:$0xf]
        %v1755 = vld [vmem:[%s1751 + $0xc] sm:$0xf]
        %v1756 = vld [vmem:[%s1751 + $0x10] sm:$0xf]
        %v1757 = vld [vmem:[%s1751 + $0x14] sm:$0xf]
        %v1758 = vld [vmem:[%s1751 + $0x18] sm:$0xf]
        %v1759 = vld [vmem:[%s1751 + $0x1c] sm:$0xf]
        %v1760 = vld [vmem:[%s1751 + $0x20] sm:$0xf]
        %v1761 = vld [vmem:[%s1751 + $0x24] sm:$0xf]
        %v1762 = vld [vmem:[%s1751 + $0x28] sm:$0xf]
        %v1763 = vld [vmem:[%s1751 + $0x2c] sm:$0xf]
        %v1764 = vld [vmem:[%s1751 + $0x30] sm:$0xf]
        %v1765 = vld [vmem:[%s1751 + $0x34] sm:$0xf]
        %v1766 = vld [vmem:[%s1751 + $0x38] sm:$0xf]
        %v1767 = vld [vmem:[%s1751 + $0x3c] sm:$0xf]
        %v1768 = vld [vmem:[%s1751 + $0x40] sm:$0xf]
        %v1769 = vld [vmem:[%s1751 + $0x44] sm:$0xf]
        %v1770 = vld [vmem:[%s1751 + $0x48] sm:$0xf]
        %v1771 = vld [vmem:[%s1751 + $0x4c] sm:$0xf]
        %v1772 = vld [vmem:[%s1751 + $0x50] sm:$0xf]
        %v1773 = vld [vmem:[%s1751 + $0x54] sm:$0xf]
        %v1774 = vld [vmem:[%s1751 + $0x58] sm:$0xf]
        %v1775 = vld [vmem:[%s1751 + $0x5c] sm:$0xf]
        %v1776 = vld [vmem:[%s1751 + $0x60] sm:$0xf]
        %v1777 = vld [vmem:[%s1751 + $0x64] sm:$0xf]
        %v1778 = vld [vmem:[%s1751 + $0x68] sm:$0xf]
        %v1779 = vld [vmem:[%s1751 + $0x6c] sm:$0xf]
        %v1780 = vld [vmem:[%s1751 + $0x70] sm:$0xf]
        %v1781 = vld [vmem:[%s1751 + $0x74] sm:$0xf]
        %v1782 = vld [vmem:[%s1751 + $0x78] sm:$0xf]
        %v1783 = vld [vmem:[%s1751 + $0x7c] sm:$0xf]
        %v1816 = vunpack.c.l.b16 %v1752
        %v1817 = vunpack.c.l.b16 %v1753
        %v1818 = vunpack.c.l.b16 %v1754
        %v1819 = vunpack.c.l.b16 %v1755
        %v1820 = vunpack.c.l.b16 %v1756
        %v1821 = vunpack.c.l.b16 %v1757
        %v1822 = vunpack.c.l.b16 %v1758
        %v1823 = vunpack.c.l.b16 %v1759
        %v1824 = vunpack.c.l.b16 %v1760
        %v1825 = vunpack.c.l.b16 %v1761
        %v1826 = vunpack.c.l.b16 %v1762
        %v1827 = vunpack.c.l.b16 %v1763
        %v1828 = vunpack.c.l.b16 %v1764
        %v1829 = vunpack.c.l.b16 %v1765
        %v1830 = vunpack.c.l.b16 %v1766
        %v1831 = vunpack.c.l.b16 %v1767
        %v1832 = vunpack.c.l.b16 %v1768
        %v1833 = vunpack.c.l.b16 %v1769
        %v1834 = vunpack.c.l.b16 %v1770
        %v1835 = vunpack.c.l.b16 %v1771
        %v1836 = vunpack.c.l.b16 %v1772
        %v1837 = vunpack.c.l.b16 %v1773
        %v1838 = vunpack.c.l.b16 %v1774
        %v1839 = vunpack.c.l.b16 %v1775
        %v1840 = vunpack.c.l.b16 %v1776
        %v1841 = vunpack.c.l.b16 %v1777
        %v1842 = vunpack.c.l.b16 %v1778
        %v1843 = vunpack.c.l.b16 %v1779
        %v1844 = vunpack.c.l.b16 %v1780
        %v1845 = vunpack.c.l.b16 %v1781
        %v1846 = vunpack.c.l.b16 %v1782
        %v1847 = vunpack.c.l.b16 %v1783
        %v1848 = vpack.c.b16 %v1817, %v1816
        %v1849 = vpack.c.b16 %v1819, %v1818
        %v1850 = vpack.c.b16 %v1821, %v1820
        %v1851 = vpack.c.b16 %v1823, %v1822
        %v1852 = vpack.c.b16 %v1825, %v1824
        %v1853 = vpack.c.b16 %v1827, %v1826
        %v1854 = vpack.c.b16 %v1829, %v1828
        %v1855 = vpack.c.b16 %v1831, %v1830
        %v1856 = vpack.c.b16 %v1833, %v1832
        %v1857 = vpack.c.b16 %v1835, %v1834
        %v1858 = vpack.c.b16 %v1837, %v1836
        %v1859 = vpack.c.b16 %v1839, %v1838
        %v1860 = vpack.c.b16 %v1841, %v1840
        %v1861 = vpack.c.b16 %v1843, %v1842
        %v1862 = vpack.c.b16 %v1845, %v1844
        %v1863 = vpack.c.b16 %v1847, %v1846
        %1880 = vmatpush.bf16.msra.mxu0 %v1855
        %1881 = vmatpush.bf16.msra.mxu0 %v1854
        %1882 = vmatpush.bf16.msra.mxu0 %v1853
        %1883 = vmatpush.bf16.msra.mxu0 %v1852
        %1884 = vmatpush.bf16.msra.mxu0 %v1851
        %1885 = vmatpush.bf16.msra.mxu0 %v1850
        %1886 = vmatpush.bf16.msra.mxu0 %v1849
        %1887 = vmatpush.bf16.msra.mxu0 %v1848
        %1888 = vmatmul.bf16.gmra.mxu0 %v1747
        %v1889 = vpop.f32.mrf.mxu0
        %v1890 = vadd.f32 0.0, %v1889
        %v1891 = vpop.f32.mrf.mxu0
        %v1892 = vadd.f32 0.0, %v1891
        %1893 = vmatmul.bf16.gmra.mxu0 %v1749
        %v1894 = vpop.f32.mrf.mxu0
        %v1895 = vadd.f32 0.0, %v1894
        %v1896 = vpop.f32.mrf.mxu0
        %v1897 = vadd.f32 0.0, %v1896
        %1898 = vdwg.mxu0
        %1899 = vmatpush.bf16.msra.mxu0 %v1863
        %1900 = vmatpush.bf16.msra.mxu0 %v1862
        %1901 = vmatpush.bf16.msra.mxu0 %v1861
        %1902 = vmatpush.bf16.msra.mxu0 %v1860
        %1903 = vmatpush.bf16.msra.mxu0 %v1859
        %1904 = vmatpush.bf16.msra.mxu0 %v1858
        %1905 = vmatpush.bf16.msra.mxu0 %v1857
        %1906 = vmatpush.bf16.msra.mxu0 %v1856
        %1907 = vmatmul.bf16.gmra.mxu0 %v1748
        %v1908 = vpop.f32.mrf.mxu0
        %v1909 = vadd.f32 %v1890, %v1908
        %v1910 = vpop.f32.mrf.mxu0
        %v1911 = vadd.f32 %v1892, %v1910
        %1912 = vmatmul.bf16.gmra.mxu0 %v1750
        %v1913 = vpop.f32.mrf.mxu0
        %v1914 = vadd.f32 %v1895, %v1913
        %v1915 = vpop.f32.mrf.mxu0
        %v1916 = vadd.f32 %v1897, %v1915
        %1917 = vdwg.mxu0
        %v1918 = vadd.f32 %v1743, %v1909
        %v1919 = vadd.f32 %v1744, %v1911
        %v1920 = vadd.f32 %v1745, %v1914
        %v1921 = vadd.f32 %v1746, %v1916
        %v1922 = vpack.c.bf16 %v755, %v753
        %v1923 = vpack.c.bf16 %v854, %v852
        %v1924 = vpack.c.bf16 %v760, %v758
        %v1925 = vpack.c.bf16 %v859, %v857
        %s1926 = scalar_lea.vmem [#allocation2], 768
        %v1927 = vld [vmem:[%s1926] sm:$0xf]
        %v1928 = vld [vmem:[%s1926 + $0x4] sm:$0xf]
        %v1929 = vld [vmem:[%s1926 + $0x8] sm:$0xf]
        %v1930 = vld [vmem:[%s1926 + $0xc] sm:$0xf]
        %v1931 = vld [vmem:[%s1926 + $0x10] sm:$0xf]
        %v1932 = vld [vmem:[%s1926 + $0x14] sm:$0xf]
        %v1933 = vld [vmem:[%s1926 + $0x18] sm:$0xf]
        %v1934 = vld [vmem:[%s1926 + $0x1c] sm:$0xf]
        %v1935 = vld [vmem:[%s1926 + $0x20] sm:$0xf]
        %v1936 = vld [vmem:[%s1926 + $0x24] sm:$0xf]
        %v1937 = vld [vmem:[%s1926 + $0x28] sm:$0xf]
        %v1938 = vld [vmem:[%s1926 + $0x2c] sm:$0xf]
        %v1939 = vld [vmem:[%s1926 + $0x30] sm:$0xf]
        %v1940 = vld [vmem:[%s1926 + $0x34] sm:$0xf]
        %v1941 = vld [vmem:[%s1926 + $0x38] sm:$0xf]
        %v1942 = vld [vmem:[%s1926 + $0x3c] sm:$0xf]
        %v1943 = vld [vmem:[%s1926 + $0x40] sm:$0xf]
        %v1944 = vld [vmem:[%s1926 + $0x44] sm:$0xf]
        %v1945 = vld [vmem:[%s1926 + $0x48] sm:$0xf]
        %v1946 = vld [vmem:[%s1926 + $0x4c] sm:$0xf]
        %v1947 = vld [vmem:[%s1926 + $0x50] sm:$0xf]
        %v1948 = vld [vmem:[%s1926 + $0x54] sm:$0xf]
        %v1949 = vld [vmem:[%s1926 + $0x58] sm:$0xf]
        %v1950 = vld [vmem:[%s1926 + $0x5c] sm:$0xf]
        %v1951 = vld [vmem:[%s1926 + $0x60] sm:$0xf]
        %v1952 = vld [vmem:[%s1926 + $0x64] sm:$0xf]
        %v1953 = vld [vmem:[%s1926 + $0x68] sm:$0xf]
        %v1954 = vld [vmem:[%s1926 + $0x6c] sm:$0xf]
        %v1955 = vld [vmem:[%s1926 + $0x70] sm:$0xf]
        %v1956 = vld [vmem:[%s1926 + $0x74] sm:$0xf]
        %v1957 = vld [vmem:[%s1926 + $0x78] sm:$0xf]
        %v1958 = vld [vmem:[%s1926 + $0x7c] sm:$0xf]
        %v1991 = vunpack.c.l.b16 %v1927
        %v1992 = vunpack.c.l.b16 %v1928
        %v1993 = vunpack.c.l.b16 %v1929
        %v1994 = vunpack.c.l.b16 %v1930
        %v1995 = vunpack.c.l.b16 %v1931
        %v1996 = vunpack.c.l.b16 %v1932
        %v1997 = vunpack.c.l.b16 %v1933
        %v1998 = vunpack.c.l.b16 %v1934
        %v1999 = vunpack.c.l.b16 %v1935
        %v2000 = vunpack.c.l.b16 %v1936
        %v2001 = vunpack.c.l.b16 %v1937
        %v2002 = vunpack.c.l.b16 %v1938
        %v2003 = vunpack.c.l.b16 %v1939
        %v2004 = vunpack.c.l.b16 %v1940
        %v2005 = vunpack.c.l.b16 %v1941
        %v2006 = vunpack.c.l.b16 %v1942
        %v2007 = vunpack.c.l.b16 %v1943
        %v2008 = vunpack.c.l.b16 %v1944
        %v2009 = vunpack.c.l.b16 %v1945
        %v2010 = vunpack.c.l.b16 %v1946
        %v2011 = vunpack.c.l.b16 %v1947
        %v2012 = vunpack.c.l.b16 %v1948
        %v2013 = vunpack.c.l.b16 %v1949
        %v2014 = vunpack.c.l.b16 %v1950
        %v2015 = vunpack.c.l.b16 %v1951
        %v2016 = vunpack.c.l.b16 %v1952
        %v2017 = vunpack.c.l.b16 %v1953
        %v2018 = vunpack.c.l.b16 %v1954
        %v2019 = vunpack.c.l.b16 %v1955
        %v2020 = vunpack.c.l.b16 %v1956
        %v2021 = vunpack.c.l.b16 %v1957
        %v2022 = vunpack.c.l.b16 %v1958
        %v2023 = vpack.c.b16 %v1992, %v1991
        %v2024 = vpack.c.b16 %v1994, %v1993
        %v2025 = vpack.c.b16 %v1996, %v1995
        %v2026 = vpack.c.b16 %v1998, %v1997
        %v2027 = vpack.c.b16 %v2000, %v1999
        %v2028 = vpack.c.b16 %v2002, %v2001
        %v2029 = vpack.c.b16 %v2004, %v2003
        %v2030 = vpack.c.b16 %v2006, %v2005
        %v2031 = vpack.c.b16 %v2008, %v2007
        %v2032 = vpack.c.b16 %v2010, %v2009
        %v2033 = vpack.c.b16 %v2012, %v2011
        %v2034 = vpack.c.b16 %v2014, %v2013
        %v2035 = vpack.c.b16 %v2016, %v2015
        %v2036 = vpack.c.b16 %v2018, %v2017
        %v2037 = vpack.c.b16 %v2020, %v2019
        %v2038 = vpack.c.b16 %v2022, %v2021
        %2055 = vmatpush.bf16.msra.mxu0 %v2030
        %2056 = vmatpush.bf16.msra.mxu0 %v2029
        %2057 = vmatpush.bf16.msra.mxu0 %v2028
        %2058 = vmatpush.bf16.msra.mxu0 %v2027
        %2059 = vmatpush.bf16.msra.mxu0 %v2026
        %2060 = vmatpush.bf16.msra.mxu0 %v2025
        %2061 = vmatpush.bf16.msra.mxu0 %v2024
        %2062 = vmatpush.bf16.msra.mxu0 %v2023
        %2063 = vmatmul.bf16.gmra.mxu0 %v1922
        %v2064 = vpop.f32.mrf.mxu0
        %v2065 = vadd.f32 0.0, %v2064
        %v2066 = vpop.f32.mrf.mxu0
        %v2067 = vadd.f32 0.0, %v2066
        %2068 = vmatmul.bf16.gmra.mxu0 %v1924
        %v2069 = vpop.f32.mrf.mxu0
        %v2070 = vadd.f32 0.0, %v2069
        %v2071 = vpop.f32.mrf.mxu0
        %v2072 = vadd.f32 0.0, %v2071
        %2073 = vdwg.mxu0
        %2074 = vmatpush.bf16.msra.mxu0 %v2038
        %2075 = vmatpush.bf16.msra.mxu0 %v2037
        %2076 = vmatpush.bf16.msra.mxu0 %v2036
        %2077 = vmatpush.bf16.msra.mxu0 %v2035
        %2078 = vmatpush.bf16.msra.mxu0 %v2034
        %2079 = vmatpush.bf16.msra.mxu0 %v2033
        %2080 = vmatpush.bf16.msra.mxu0 %v2032
        %2081 = vmatpush.bf16.msra.mxu0 %v2031
        %2082 = vmatmul.bf16.gmra.mxu0 %v1923
        %v2083 = vpop.f32.mrf.mxu0
        %v2084 = vadd.f32 %v2065, %v2083
        %v2085 = vpop.f32.mrf.mxu0
        %v2086 = vadd.f32 %v2067, %v2085
        %2087 = vmatmul.bf16.gmra.mxu0 %v1925
        %v2088 = vpop.f32.mrf.mxu0
        %v2089 = vadd.f32 %v2070, %v2088
        %v2090 = vpop.f32.mrf.mxu0
        %v2091 = vadd.f32 %v2072, %v2090
        %2092 = vdwg.mxu0
        %v2093 = vadd.f32 %v1918, %v2084
        %v2094 = vadd.f32 %v1919, %v2086
        %v2095 = vadd.f32 %v1920, %v2089
        %v2096 = vadd.f32 %v1921, %v2091
        %v2097 = vpack.c.bf16 %v765, %v763
        %v2098 = vpack.c.bf16 %v864, %v862
        %v2099 = vpack.c.bf16 %v770, %v768
        %v2100 = vpack.c.bf16 %v869, %v867
        %s2101 = scalar_lea.vmem [#allocation2], 896
        %v2102 = vld [vmem:[%s2101] sm:$0xf]
        %v2103 = vld [vmem:[%s2101 + $0x4] sm:$0xf]
        %v2104 = vld [vmem:[%s2101 + $0x8] sm:$0xf]
        %v2105 = vld [vmem:[%s2101 + $0xc] sm:$0xf]
        %v2106 = vld [vmem:[%s2101 + $0x10] sm:$0xf]
        %v2107 = vld [vmem:[%s2101 + $0x14] sm:$0xf]
        %v2108 = vld [vmem:[%s2101 + $0x18] sm:$0xf]
        %v2109 = vld [vmem:[%s2101 + $0x1c] sm:$0xf]
        %v2110 = vld [vmem:[%s2101 + $0x20] sm:$0xf]
        %v2111 = vld [vmem:[%s2101 + $0x24] sm:$0xf]
        %v2112 = vld [vmem:[%s2101 + $0x28] sm:$0xf]
        %v2113 = vld [vmem:[%s2101 + $0x2c] sm:$0xf]
        %v2114 = vld [vmem:[%s2101 + $0x30] sm:$0xf]
        %v2115 = vld [vmem:[%s2101 + $0x34] sm:$0xf]
        %v2116 = vld [vmem:[%s2101 + $0x38] sm:$0xf]
        %v2117 = vld [vmem:[%s2101 + $0x3c] sm:$0xf]
        %v2118 = vld [vmem:[%s2101 + $0x40] sm:$0xf]
        %v2119 = vld [vmem:[%s2101 + $0x44] sm:$0xf]
        %v2120 = vld [vmem:[%s2101 + $0x48] sm:$0xf]
        %v2121 = vld [vmem:[%s2101 + $0x4c] sm:$0xf]
        %v2122 = vld [vmem:[%s2101 + $0x50] sm:$0xf]
        %v2123 = vld [vmem:[%s2101 + $0x54] sm:$0xf]
        %v2124 = vld [vmem:[%s2101 + $0x58] sm:$0xf]
        %v2125 = vld [vmem:[%s2101 + $0x5c] sm:$0xf]
        %v2126 = vld [vmem:[%s2101 + $0x60] sm:$0xf]
        %v2127 = vld [vmem:[%s2101 + $0x64] sm:$0xf]
        %v2128 = vld [vmem:[%s2101 + $0x68] sm:$0xf]
        %v2129 = vld [vmem:[%s2101 + $0x6c] sm:$0xf]
        %v2130 = vld [vmem:[%s2101 + $0x70] sm:$0xf]
        %v2131 = vld [vmem:[%s2101 + $0x74] sm:$0xf]
        %v2132 = vld [vmem:[%s2101 + $0x78] sm:$0xf]
        %v2133 = vld [vmem:[%s2101 + $0x7c] sm:$0xf]
        %v2166 = vunpack.c.l.b16 %v2102
        %v2167 = vunpack.c.l.b16 %v2103
        %v2168 = vunpack.c.l.b16 %v2104
        %v2169 = vunpack.c.l.b16 %v2105
        %v2170 = vunpack.c.l.b16 %v2106
        %v2171 = vunpack.c.l.b16 %v2107
        %v2172 = vunpack.c.l.b16 %v2108
        %v2173 = vunpack.c.l.b16 %v2109
        %v2174 = vunpack.c.l.b16 %v2110
        %v2175 = vunpack.c.l.b16 %v2111
        %v2176 = vunpack.c.l.b16 %v2112
        %v2177 = vunpack.c.l.b16 %v2113
        %v2178 = vunpack.c.l.b16 %v2114
        %v2179 = vunpack.c.l.b16 %v2115
        %v2180 = vunpack.c.l.b16 %v2116
        %v2181 = vunpack.c.l.b16 %v2117
        %v2182 = vunpack.c.l.b16 %v2118
        %v2183 = vunpack.c.l.b16 %v2119
        %v2184 = vunpack.c.l.b16 %v2120
        %v2185 = vunpack.c.l.b16 %v2121
        %v2186 = vunpack.c.l.b16 %v2122
        %v2187 = vunpack.c.l.b16 %v2123
        %v2188 = vunpack.c.l.b16 %v2124
        %v2189 = vunpack.c.l.b16 %v2125
        %v2190 = vunpack.c.l.b16 %v2126
        %v2191 = vunpack.c.l.b16 %v2127
        %v2192 = vunpack.c.l.b16 %v2128
        %v2193 = vunpack.c.l.b16 %v2129
        %v2194 = vunpack.c.l.b16 %v2130
        %v2195 = vunpack.c.l.b16 %v2131
        %v2196 = vunpack.c.l.b16 %v2132
        %v2197 = vunpack.c.l.b16 %v2133
        %v2198 = vpack.c.b16 %v2167, %v2166
        %v2199 = vpack.c.b16 %v2169, %v2168
        %v2200 = vpack.c.b16 %v2171, %v2170
        %v2201 = vpack.c.b16 %v2173, %v2172
        %v2202 = vpack.c.b16 %v2175, %v2174
        %v2203 = vpack.c.b16 %v2177, %v2176
        %v2204 = vpack.c.b16 %v2179, %v2178
        %v2205 = vpack.c.b16 %v2181, %v2180
        %v2206 = vpack.c.b16 %v2183, %v2182
        %v2207 = vpack.c.b16 %v2185, %v2184
        %v2208 = vpack.c.b16 %v2187, %v2186
        %v2209 = vpack.c.b16 %v2189, %v2188
        %v2210 = vpack.c.b16 %v2191, %v2190
        %v2211 = vpack.c.b16 %v2193, %v2192
        %v2212 = vpack.c.b16 %v2195, %v2194
        %v2213 = vpack.c.b16 %v2197, %v2196
        %2230 = vmatpush.bf16.msra.mxu0 %v2205
        %2231 = vmatpush.bf16.msra.mxu0 %v2204
        %2232 = vmatpush.bf16.msra.mxu0 %v2203
        %2233 = vmatpush.bf16.msra.mxu0 %v2202
        %2234 = vmatpush.bf16.msra.mxu0 %v2201
        %2235 = vmatpush.bf16.msra.mxu0 %v2200
        %2236 = vmatpush.bf16.msra.mxu0 %v2199
        %2237 = vmatpush.bf16.msra.mxu0 %v2198
        %2238 = vmatmul.bf16.gmra.mxu0 %v2097
        %v2239 = vpop.f32.mrf.mxu0
        %v2240 = vadd.f32 0.0, %v2239
        %v2241 = vpop.f32.mrf.mxu0
        %v2242 = vadd.f32 0.0, %v2241
        %2243 = vmatmul.bf16.gmra.mxu0 %v2099
        %v2244 = vpop.f32.mrf.mxu0
        %v2245 = vadd.f32 0.0, %v2244
        %v2246 = vpop.f32.mrf.mxu0
        %v2247 = vadd.f32 0.0, %v2246
        %2248 = vdwg.mxu0
        %2249 = vmatpush.bf16.msra.mxu0 %v2213
        %2250 = vmatpush.bf16.msra.mxu0 %v2212
        %2251 = vmatpush.bf16.msra.mxu0 %v2211
        %2252 = vmatpush.bf16.msra.mxu0 %v2210
        %2253 = vmatpush.bf16.msra.mxu0 %v2209
        %2254 = vmatpush.bf16.msra.mxu0 %v2208
        %2255 = vmatpush.bf16.msra.mxu0 %v2207
        %2256 = vmatpush.bf16.msra.mxu0 %v2206
        %2257 = vmatmul.bf16.gmra.mxu0 %v2098
        %v2258 = vpop.f32.mrf.mxu0
        %v2259 = vadd.f32 %v2240, %v2258
        %v2260 = vpop.f32.mrf.mxu0
        %v2261 = vadd.f32 %v2242, %v2260
        %2262 = vmatmul.bf16.gmra.mxu0 %v2100
        %v2263 = vpop.f32.mrf.mxu0
        %v2264 = vadd.f32 %v2245, %v2263
        %v2265 = vpop.f32.mrf.mxu0
        %v2266 = vadd.f32 %v2247, %v2265
        %2267 = vdwg.mxu0
        %v2268 = vadd.f32 %v2093, %v2259
        %v2269 = vadd.f32 %v2094, %v2261
        %v2270 = vadd.f32 %v2095, %v2264
        %v2271 = vadd.f32 %v2096, %v2266
        %v2272 = vpack.c.bf16 %v775, %v773
        %v2273 = vpack.c.bf16 %v874, %v872
        %v2274 = vpack.c.bf16 %v780, %v778
        %v2275 = vpack.c.bf16 %v879, %v877
        %s2276 = scalar_lea.vmem [#allocation2], 1024
        %v2277 = vld [vmem:[%s2276] sm:$0xf]
        %v2278 = vld [vmem:[%s2276 + $0x4] sm:$0xf]
        %v2279 = vld [vmem:[%s2276 + $0x8] sm:$0xf]
        %v2280 = vld [vmem:[%s2276 + $0xc] sm:$0xf]
        %v2281 = vld [vmem:[%s2276 + $0x10] sm:$0xf]
        %v2282 = vld [vmem:[%s2276 + $0x14] sm:$0xf]
        %v2283 = vld [vmem:[%s2276 + $0x18] sm:$0xf]
        %v2284 = vld [vmem:[%s2276 + $0x1c] sm:$0xf]
        %v2285 = vld [vmem:[%s2276 + $0x20] sm:$0xf]
        %v2286 = vld [vmem:[%s2276 + $0x24] sm:$0xf]
        %v2287 = vld [vmem:[%s2276 + $0x28] sm:$0xf]
        %v2288 = vld [vmem:[%s2276 + $0x2c] sm:$0xf]
        %v2289 = vld [vmem:[%s2276 + $0x30] sm:$0xf]
        %v2290 = vld [vmem:[%s2276 + $0x34] sm:$0xf]
        %v2291 = vld [vmem:[%s2276 + $0x38] sm:$0xf]
        %v2292 = vld [vmem:[%s2276 + $0x3c] sm:$0xf]
        %v2293 = vld [vmem:[%s2276 + $0x40] sm:$0xf]
        %v2294 = vld [vmem:[%s2276 + $0x44] sm:$0xf]
        %v2295 = vld [vmem:[%s2276 + $0x48] sm:$0xf]
        %v2296 = vld [vmem:[%s2276 + $0x4c] sm:$0xf]
        %v2297 = vld [vmem:[%s2276 + $0x50] sm:$0xf]
        %v2298 = vld [vmem:[%s2276 + $0x54] sm:$0xf]
        %v2299 = vld [vmem:[%s2276 + $0x58] sm:$0xf]
        %v2300 = vld [vmem:[%s2276 + $0x5c] sm:$0xf]
        %v2301 = vld [vmem:[%s2276 + $0x60] sm:$0xf]
        %v2302 = vld [vmem:[%s2276 + $0x64] sm:$0xf]
        %v2303 = vld [vmem:[%s2276 + $0x68] sm:$0xf]
        %v2304 = vld [vmem:[%s2276 + $0x6c] sm:$0xf]
        %v2305 = vld [vmem:[%s2276 + $0x70] sm:$0xf]
        %v2306 = vld [vmem:[%s2276 + $0x74] sm:$0xf]
        %v2307 = vld [vmem:[%s2276 + $0x78] sm:$0xf]
        %v2308 = vld [vmem:[%s2276 + $0x7c] sm:$0xf]
        %v2341 = vunpack.c.l.b16 %v2277
        %v2342 = vunpack.c.l.b16 %v2278
        %v2343 = vunpack.c.l.b16 %v2279
        %v2344 = vunpack.c.l.b16 %v2280
        %v2345 = vunpack.c.l.b16 %v2281
        %v2346 = vunpack.c.l.b16 %v2282
        %v2347 = vunpack.c.l.b16 %v2283
        %v2348 = vunpack.c.l.b16 %v2284
        %v2349 = vunpack.c.l.b16 %v2285
        %v2350 = vunpack.c.l.b16 %v2286
        %v2351 = vunpack.c.l.b16 %v2287
        %v2352 = vunpack.c.l.b16 %v2288
        %v2353 = vunpack.c.l.b16 %v2289
        %v2354 = vunpack.c.l.b16 %v2290
        %v2355 = vunpack.c.l.b16 %v2291
        %v2356 = vunpack.c.l.b16 %v2292
        %v2357 = vunpack.c.l.b16 %v2293
        %v2358 = vunpack.c.l.b16 %v2294
        %v2359 = vunpack.c.l.b16 %v2295
        %v2360 = vunpack.c.l.b16 %v2296
        %v2361 = vunpack.c.l.b16 %v2297
        %v2362 = vunpack.c.l.b16 %v2298
        %v2363 = vunpack.c.l.b16 %v2299
        %v2364 = vunpack.c.l.b16 %v2300
        %v2365 = vunpack.c.l.b16 %v2301
        %v2366 = vunpack.c.l.b16 %v2302
        %v2367 = vunpack.c.l.b16 %v2303
        %v2368 = vunpack.c.l.b16 %v2304
        %v2369 = vunpack.c.l.b16 %v2305
        %v2370 = vunpack.c.l.b16 %v2306
        %v2371 = vunpack.c.l.b16 %v2307
        %v2372 = vunpack.c.l.b16 %v2308
        %v2373 = vpack.c.b16 %v2342, %v2341
        %v2374 = vpack.c.b16 %v2344, %v2343
        %v2375 = vpack.c.b16 %v2346, %v2345
        %v2376 = vpack.c.b16 %v2348, %v2347
        %v2377 = vpack.c.b16 %v2350, %v2349
        %v2378 = vpack.c.b16 %v2352, %v2351
        %v2379 = vpack.c.b16 %v2354, %v2353
        %v2380 = vpack.c.b16 %v2356, %v2355
        %v2381 = vpack.c.b16 %v2358, %v2357
        %v2382 = vpack.c.b16 %v2360, %v2359
        %v2383 = vpack.c.b16 %v2362, %v2361
        %v2384 = vpack.c.b16 %v2364, %v2363
        %v2385 = vpack.c.b16 %v2366, %v2365
        %v2386 = vpack.c.b16 %v2368, %v2367
        %v2387 = vpack.c.b16 %v2370, %v2369
        %v2388 = vpack.c.b16 %v2372, %v2371
        %2405 = vmatpush.bf16.msra.mxu0 %v2380
        %2406 = vmatpush.bf16.msra.mxu0 %v2379
        %2407 = vmatpush.bf16.msra.mxu0 %v2378
        %2408 = vmatpush.bf16.msra.mxu0 %v2377
        %2409 = vmatpush.bf16.msra.mxu0 %v2376
        %2410 = vmatpush.bf16.msra.mxu0 %v2375
        %2411 = vmatpush.bf16.msra.mxu0 %v2374
        %2412 = vmatpush.bf16.msra.mxu0 %v2373
        %2413 = vmatmul.bf16.gmra.mxu0 %v2272
        %v2414 = vpop.f32.mrf.mxu0
        %v2415 = vadd.f32 0.0, %v2414
        %v2416 = vpop.f32.mrf.mxu0
        %v2417 = vadd.f32 0.0, %v2416
        %2418 = vmatmul.bf16.gmra.mxu0 %v2274
        %v2419 = vpop.f32.mrf.mxu0
        %v2420 = vadd.f32 0.0, %v2419
        %v2421 = vpop.f32.mrf.mxu0
        %v2422 = vadd.f32 0.0, %v2421
        %2423 = vdwg.mxu0
        %2424 = vmatpush.bf16.msra.mxu0 %v2388
        %2425 = vmatpush.bf16.msra.mxu0 %v2387
        %2426 = vmatpush.bf16.msra.mxu0 %v2386
        %2427 = vmatpush.bf16.msra.mxu0 %v2385
        %2428 = vmatpush.bf16.msra.mxu0 %v2384
        %2429 = vmatpush.bf16.msra.mxu0 %v2383
        %2430 = vmatpush.bf16.msra.mxu0 %v2382
        %2431 = vmatpush.bf16.msra.mxu0 %v2381
        %2432 = vmatmul.bf16.gmra.mxu0 %v2273
        %v2433 = vpop.f32.mrf.mxu0
        %v2434 = vadd.f32 %v2415, %v2433
        %v2435 = vpop.f32.mrf.mxu0
        %v2436 = vadd.f32 %v2417, %v2435
        %2437 = vmatmul.bf16.gmra.mxu0 %v2275
        %v2438 = vpop.f32.mrf.mxu0
        %v2439 = vadd.f32 %v2420, %v2438
        %v2440 = vpop.f32.mrf.mxu0
        %v2441 = vadd.f32 %v2422, %v2440
        %2442 = vdwg.mxu0
        %v2443 = vadd.f32 %v2268, %v2434
        %v2444 = vadd.f32 %v2269, %v2436
        %v2445 = vadd.f32 %v2270, %v2439
        %v2446 = vadd.f32 %v2271, %v2441
        %v2447 = vld [vmem:[%s4] sm:$0xff]
        %v2448 = vld [vmem:[%s4 + $0x8] sm:$0xff]
        %v2449 = vld [vmem:[%s4 + $0x10] sm:$0xff]
        %v2450 = vld [vmem:[%s4 + $0x18] sm:$0xff]
        %2452 = vset.pattern.permute.xlu0 0
        %2453 = vperm.xlu0 %2452, %v2447
        %v2454 = vpop.permute.xlu0 %2453
        %2457 = vset.pattern.permute.xlu0 0
        %2458 = vperm.xlu0 %2457, %v2448
        %v2459 = vpop.permute.xlu0 %2458
        %2462 = vset.pattern.permute.xlu0 0
        %2463 = vperm.xlu0 %2462, %v2449
        %v2464 = vpop.permute.xlu0 %2463
        %2467 = vset.pattern.permute.xlu0 0
        %2468 = vperm.xlu0 %2467, %v2450
        %v2469 = vpop.permute.xlu0 %2468
        %v2471 = vadd.f32 %v2443, %v2454
        %v2472 = vadd.f32 %v2444, %v2459
        %v2473 = vadd.f32 %v2445, %v2464
        %v2474 = vadd.f32 %v2446, %v2469
        %vm2475 = vcmp.gt.f32.partialorder %v2471, 0.0
        %vm2476 = vcmp.gt.f32.partialorder %v2472, 0.0
        %vm2477 = vcmp.gt.f32.partialorder %v2473, 0.0
        %vm2478 = vcmp.gt.f32.partialorder %v2474, 0.0
        %v2479 = vmul.f32 %v2471, -0.1
        %v2480 = vmul.f32 %v2472, -0.1
        %v2481 = vmul.f32 %v2473, -0.1
        %v2482 = vmul.f32 %v2474, -0.1
        %v2483 = vsel %vm2475, %v2471, %v2479
        %v2484 = vsel %vm2476, %v2472, %v2480
        %v2485 = vsel %vm2477, %v2473, %v2481
        %v2486 = vsel %vm2478, %v2474, %v2482
        %2487 = vst [vmem:[%s268] sm:$0xff] %v2483
        %2488 = vst [vmem:[%s268 + $0x8] sm:$0xff] %v2484
        %2489 = vst [vmem:[%s268 + $0x10] sm:$0xff] %v2485
        %2490 = vst [vmem:[%s268 + $0x18] sm:$0xff] %v2486
        %p2491 = scmp.lt.s32.totalorder %s18, 1
        %s2492 = scalar_select %p2491, %s18, 1
        %s2493 = smul.addr %s2492, 4
        %s2494 = smul.addr %s2493, 8
        %s2495 = scalar_lea.vmem %s6, %s2494
        // Predicated region
        $region49: #{model_forward.1} parent=43 // pred_check
          %p2496 = pneg %p167
        $region50: #{model_forward.1} parent=43 // pred_check_branch
          %2498 = sbr.rel (%p2496) target = $region52
        $region51: #{model_forward.1} parent=43 // pred_region
          _
        $region52: #{model_forward.1} parent=43 // pred_fallthru
          _
      $region44: #{model_forward.1} parent=5 // pred_fallthru
        _
      %p2499 = scmp.le.s32.totalorder 2, %s13
      // Predicated region
      $region53: #{model_forward.1} parent=5 // pred_check
        %p2500 = pneg %p2499
      $region54: #{model_forward.1} parent=5 // pred_check_branch
        %2502 = sbr.rel (%p2500) target = $region56
      $region55: #{model_forward.1} parent=5 // pred_region
        %s2503 = ssub.s32 %s13, 2
        // Predicated region
        $region57: #{model_forward.1} parent=55 // pred_check
          %p2504 = pneg %p173
        $region58: #{model_forward.1} parent=55 // pred_check_branch
          %2506 = sbr.rel (%p2504) target = $region60
        $region59: #{model_forward.1} parent=55 // pred_region
          %p2507 = scmp.lt.s32.totalorder %s19, 1
          %s2508 = scalar_select %p2507, %s19, 1
          %s2509 = smul.addr %s2508, 4
          %s2510 = smul.addr %s2509, 8
          %s2511 = scalar_lea.vmem %s6, %s2510
        $region60: #{model_forward.1} parent=55 // pred_fallthru
          _
      $region56: #{model_forward.1} parent=5 // pred_fallthru
        _
    $region6: #{model_forward.1} parent=1 // loop_footer
      %s17 = sadd.s32 1, %s13
    $region7: #{model_forward.1} parent=1 // loop_footer_branch
      %12 = sbr.rel target = $region3
    $region8: #{model_forward.1} parent=1 // loop_exit
      _
    %2512 = vsyncpa [#allocation3], 1
    %s2513 = scalar_lea.sflag [#allocation3], 1
    %2514 = vsyncpa %s2513, 1

</llo_original>
